<compile_context>
chip_gen: v6e
topology: v6e:2x2x1
jax: 0.10.0
libtpu: 0.0.40
codegen_flags: <defaults>
</compile_context>

<pallas_src>
import jax
import jax.numpy as jnp
from jax.experimental import pallas as pl
from jax.experimental.pallas import tpu as pltpu

EPS = 1e-5


def _round_up(x, m):
    return ((x + m - 1) // m) * m


def _make_kernel(L, Lp):
    def kernel(xp_ref, w1_ref, w2_ref, b1_ref, b2_ref, o_ref):
        """One block of stacked, zero-padded per-batch row slabs.

        xp_ref : (R, Cp)     bf16  channels-last input; each batch owns Lp rows:
                                   row 0 = zero pad, rows 1..L = data, rows L+1.. = zero pad
        w1_ref : (3, Cp, Cp) bf16  conv1 taps, BN1 scale folded into output columns
        w2_ref : (3, Cp, Cp) bf16  conv2 taps, BN2 scale folded into output columns
        b1_ref : (1, Cp)     f32   folded BN1 bias
        b2_ref : (1, Cp)     f32   folded BN2 bias
        o_ref  : (R, Cp)     bf16  output slab (valid rows/lanes sliced in the wrapper)
        """
        xp = xp_ref[...]                       # (R, Cp) bf16
        rows = xp.shape[0]

        # Row-validity mask built in-kernel (no 1-lane mask input DMA): a row is a
        # data row iff (row mod Lp) is in [1, L].
        r = jax.lax.broadcasted_iota(jnp.int32, (rows, 1), 0)
        rl = r % Lp
        valid = jnp.logical_and(rl >= 1, rl <= L)      # (R, 1) bool

        def conv3(inp_bf16, w_ref):
            # out[r] = inp[r-1] @ W0 + inp[r] @ W1 + inp[r+1] @ W2
            # pltpu.roll == jnp.roll semantics: roll(a, +1)[r] = a[r-1],
            # roll(a, rows-1)[r] = a[r+1]. Wrap-around rows only ever land on slab
            # pad rows, whose outputs are masked or discarded.
            a0 = jnp.dot(inp_bf16, w_ref[0], preferred_element_type=jnp.float32)
            a1 = jnp.dot(inp_bf16, w_ref[1], preferred_element_type=jnp.float32)
            a2 = jnp.dot(inp_bf16, w_ref[2], preferred_element_type=jnp.float32)
            return (pltpu.roll(a0, shift=1, axis=0) + a1
                    + pltpu.roll(a2, shift=rows - 1, axis=0))
        # TODO(synk): fuse the 3 taps into one K=3*Cp MXU call (rolled bf16 inputs,
        #             lane concat) once large-Cp shapes become compute-bound.

        # conv1 -> BN1 (scale folded into weights, bias here) -> ReLU.
        # Dropout == identity (eval mode). jnp.where re-zeroes the pad rows so they
        # act as conv2's zero padding (robust even if the ragged last block's
        # out-of-bounds VMEM rows hold NaN garbage).
        h = jnp.where(valid, jnp.maximum(conv3(xp, w1_ref) + b1_ref[...], 0.0), 0.0)

        # conv2 -> BN2 bias -> ReLU. Dropout == identity (eval mode).
        g = jnp.maximum(conv3(h.astype(xp.dtype), w2_ref) + b2_ref[...], 0.0)

        # residual add (stride=1, downsample=None) + final ReLU in f32 on the VPU,
        # stored as bf16 to halve output HBM bytes.
        o_ref[...] = jnp.maximum(g + xp.astype(jnp.float32), 0.0).astype(o_ref.dtype)

    return kernel


def basic_block3x3(x_ncl, w1, w2, bn1, bn2, *, max_rows_per_block=2048):
    """x_ncl: (N, C, L) f32; w1, w2: (Cout, Cin, 3); bn*: dict(gamma, beta, mean, var)."""
    N, Cin, L = x_ncl.shape
    Cout = w1.shape[0]
    assert Cin == Cout, "residual add with downsample=None requires inplanes == planes"

    Cp = _round_up(max(Cin, Cout), 128)   # lane-dense channels
    Lp = _round_up(L + 2, 8)              # 8-aligned per-batch row slab (incl. conv padding)
    # roll-based conv padding relies on >=1 zero pad row above AND below each slab's data
    assert Lp >= L + 2

    # --- rows per grid step --------------------------------------------------
    # Large enough to amortize the ~0.35us per-step pipeline overhead and feed the
    # MXU a tall M; small enough that double-buffered bf16 in/out blocks + f32
    # temporaries + weights fit a v7x-safe VMEM budget (64 MiB physical).
    act_bytes_per_row = Cp * 24                                   # in/out x2 buffers + temps
    act_budget = max(Lp * act_bytes_per_row, (32 << 20) - 24 * Cp * Cp)
    rows_cap = min(max_rows_per_block, max(Lp, act_budget // act_bytes_per_row))
    nb = max(1, min(rows_cap // Lp, N))
    if N > 1:
        nb = min(nb, (N + 1) // 2)   # keep >= 2 grid steps so both v7x TCs get work
    rows_blk = nb * Lp
    num_blocks = pl.cdiv(N, nb)      # ragged last block OK (mask + dropped OOB writes)

    vmem_limit = int(min(48 << 20, max(32 << 20,
        4 * rows_blk * Cp * 2        # bf16 in + bf16 out, double-buffered
        + 24 * Cp * Cp               # both conv weight stacks (worst case double-buffered)
        + 16 * rows_blk * Cp         # in-kernel f32/bf16 temporaries (generous)
        + (2 << 20))))

    # --- glue: NCL -> channels-last padded row slabs, lane padding to Cp ---
    # TODO(synk): keep activations in this channels-last bf16 slab layout between
    # stacked blocks to remove this HBM round trip (and the inverse one below).
    x_nlc = jnp.transpose(x_ncl, (0, 2, 1))
    xp = jnp.zeros((N, Lp, Cp), jnp.bfloat16)
    xp = xp.at[:, 1:L + 1, :Cin].set(x_nlc.astype(jnp.bfloat16))
    xp = xp.reshape(N * Lp, Cp)

    # --- fold BN (inference): scale into conv weight columns, keep bias separate ---
    def fold(bn):
        scale = bn["gamma"] / jnp.sqrt(bn["var"] + EPS)
        bias = bn["beta"] - bn["mean"] * scale
        return scale.astype(jnp.float32), bias.astype(jnp.float32)

    s1, b1 = fold(bn1)
    s2, b2 = fold(bn2)

    def prep_w(w, scale):
        # (Cout, Cin, K) -> (K, Cin, Cout); fold BN scale into output columns; pad lanes.
        wt = jnp.transpose(w.astype(jnp.float32), (2, 1, 0)) * scale[None, None, :]
        wp = jnp.zeros((3, Cp, Cp), jnp.float32).at[:, :w.shape[1], :w.shape[0]].set(wt)
        return wp.astype(jnp.bfloat16)

    w1p, w2p = prep_w(w1, s1), prep_w(w2, s2)
    b1p = jnp.zeros((1, Cp), jnp.float32).at[0, :Cout].set(b1)
    b2p = jnp.zeros((1, Cp), jnp.float32).at[0, :Cout].set(b2)

    kernel = _make_kernel(L, Lp)

    def call(const_pipeline_mode):
        kw = {} if const_pipeline_mode is None else {"pipeline_mode": const_pipeline_mode}
        return pl.pallas_call(
            kernel,
            out_shape=jax.ShapeDtypeStruct((N * Lp, Cp), jnp.bfloat16),
            grid=(num_blocks,),
            in_specs=[
                pl.BlockSpec((rows_blk, Cp), lambda g: (g, 0)),          # x slabs
                pl.BlockSpec((3, Cp, Cp), lambda g: (0, 0, 0), **kw),    # conv1 taps (scale folded)
                pl.BlockSpec((3, Cp, Cp), lambda g: (0, 0, 0), **kw),    # conv2 taps (scale folded)
                pl.BlockSpec((1, Cp), lambda g: (0, 0), **kw),           # BN1 bias
                pl.BlockSpec((1, Cp), lambda g: (0, 0), **kw),           # BN2 bias
            ],
            out_specs=pl.BlockSpec((rows_blk, Cp), lambda g: (g, 0)),
            compiler_params=pltpu.CompilerParams(
                dimension_semantics=("parallel",),
                vmem_limit_bytes=vmem_limit),
        )(xp, w1p, w2p, b1p, b2p)

    try:
        # Grid-invariant operands single-buffered (their index_map is constant, so
        # they are never re-DMA'd): halves the VMEM their blocks occupy.
        out_flat = call(pl.Buffered(1))
    except Exception:
        # Fallback for Pallas builds that reject buffer_count=1.
        out_flat = call(None)

    # --- glue: drop pad rows / pad lanes, back to NCL ---
    out = out_flat.reshape(N, Lp, Cp)[:, 1:L + 1, :Cout]
    return jnp.transpose(out, (0, 2, 1)).astype(x_ncl.dtype)


def _reference(x_ncl, w1, w2, bn1, bn2):
    """Pure-JAX f32 reference in NCL layout (eval-mode BN, dropout identity)."""
    def conv1d(x, w):
        return jax.lax.conv_general_dilated(
            x, w, window_strides=(1,), padding=[(1, 1)],
            dimension_numbers=("NCH", "OIH", "NCH"))

    def bn(x, p):
        g = p["gamma"][None, :, None]
        b = p["beta"][None, :, None]
        m = p["mean"][None, :, None]
        v = p["var"][None, :, None]
        return g * (x - m) / jnp.sqrt(v + EPS) + b

    h = jax.nn.relu(bn(conv1d(x_ncl, w1), bn1))
    h = jax.nn.relu(bn(conv1d(h, w2), bn2))
    return jax.nn.relu(h + x_ncl)


if __name__ == "__main__":
    # small shapes consistent with the module: N=2, C(inplanes3)=planes=8, L=16
    N, C, L = 2, 8, 16
    key = jax.random.PRNGKey(0)
    ks = jax.random.split(key, 12)

    x = jax.random.normal(ks[0], (N, C, L), dtype=jnp.float32)
    w1 = 0.2 * jax.random.normal(ks[1], (C, C, 3), dtype=jnp.float32)   # conv3x3(inplanes3, planes)
    w2 = 0.2 * jax.random.normal(ks[2], (C, C, 3), dtype=jnp.float32)   # conv3x3(planes, planes)

    bn1 = {
        "gamma": 1.0 + 0.1 * jax.random.normal(ks[3], (C,), dtype=jnp.float32),
        "beta": 0.1 * jax.random.normal(ks[4], (C,), dtype=jnp.float32),
        "mean": 0.1 * jax.random.normal(ks[5], (C,), dtype=jnp.float32),
        "var": jnp.abs(jax.random.normal(ks[6], (C,), dtype=jnp.float32)) + 0.5,
    }
    bn2 = {
        "gamma": 1.0 + 0.1 * jax.random.normal(ks[7], (C,), dtype=jnp.float32),
        "beta": 0.1 * jax.random.normal(ks[8], (C,), dtype=jnp.float32),
        "mean": 0.1 * jax.random.normal(ks[9], (C,), dtype=jnp.float32),
        "var": jnp.abs(jax.random.normal(ks[10], (C,), dtype=jnp.float32)) + 0.5,
    }

    out = basic_block3x3(x, w1, w2, bn1, bn2)
    out = jax.block_until_ready(out)

    ref = _reference(x, w1, w2, bn1, bn2)
    assert out.shape == (N, C, L)
    # bf16 MXU inputs / bf16 output with f32 accumulation -> bf16-appropriate tolerance.
    assert jnp.allclose(out, ref, atol=5e-2, rtol=5e-2), "mismatch vs reference"

    print("KERNEL_OK")
</pallas_src>

<mosaic_0001>
module attributes {stable_mosaic.version = 11 : i64} {
  func.func @kernel(%arg0: i32, %arg1: memref<24x128xbf16, #tpu.memory_space<vmem>>, %arg2: memref<3x128x128xbf16, #tpu.memory_space<vmem>>, %arg3: memref<3x128x128xbf16, #tpu.memory_space<vmem>>, %arg4: memref<1x128xf32, #tpu.memory_space<vmem>>, %arg5: memref<1x128xf32, #tpu.memory_space<vmem>>, %arg6: memref<24x128xbf16, #tpu.memory_space<vmem>>) attributes {dimension_semantics = [#tpu.dimension_semantics<parallel>], iteration_bounds = array<i64: 2>, scalar_prefetch = 0 : i64, scratch_operands = 0 : i64, tpu.core_type = #tpu.core_type<tc>, window_params = [{transform_indices = @transform_0, window_bounds = array<i64: 24, 128>}, {pipeline_mode = #tpu.pipeline_mode<synchronous>, transform_indices = @transform_1, window_bounds = array<i64: 3, 128, 128>}, {pipeline_mode = #tpu.pipeline_mode<synchronous>, transform_indices = @transform_2, window_bounds = array<i64: 3, 128, 128>}, {pipeline_mode = #tpu.pipeline_mode<synchronous>, transform_indices = @transform_3, window_bounds = array<i64: 1, 128>}, {pipeline_mode = #tpu.pipeline_mode<synchronous>, transform_indices = @transform_4, window_bounds = array<i64: 1, 128>}, {transform_indices = @transform_5, window_bounds = array<i64: 24, 128>}]} {
    %c0 = arith.constant 0 : index
    %c0_0 = arith.constant 0 : index
    %0 = vector.load %arg1[%c0, %c0_0] : memref<24x128xbf16, #tpu.memory_space<vmem>>, vector<24x128xbf16>
    %1 = tpu.iota {dimensions = array<i32: 0>} : vector<24x1xi32>
    %c24_i32 = arith.constant 24 : i32
    %c0_i32 = arith.constant 0 : i32
    %2 = arith.cmpi eq, %c24_i32, %c0_i32 : i32
    %c1_i32 = arith.constant 1 : i32
    %3 = arith.select %2, %c1_i32, %c24_i32 : i32
    %4 = vector.broadcast %3 : i32 to vector<24x1xi32>
    %5 = arith.remsi %1, %4 : vector<24x1xi32>
    %c0_i32_1 = arith.constant 0 : i32
    %6 = vector.broadcast %c0_i32_1 : i32 to vector<24x1xi32>
    %7 = arith.cmpi ne, %5, %6 : vector<24x1xi32>
    %c0_i32_2 = arith.constant 0 : i32
    %8 = vector.broadcast %c0_i32_2 : i32 to vector<24x1xi32>
    %9 = arith.cmpi slt, %5, %8 : vector<24x1xi32>
    %c0_i32_3 = arith.constant 0 : i32
    %10 = arith.cmpi slt, %3, %c0_i32_3 : i32
    %11 = vector.broadcast %10 : i1 to vector<24x1xi1>
    %12 = vector.broadcast %11 : vector<24x1xi1> to vector<24x1xi1>
    %13 = arith.xori %9, %12 : vector<24x1xi1>
    %14 = arith.andi %13, %7 : vector<24x1xi1>
    %15 = vector.broadcast %3 : i32 to vector<24x1xi32>
    %16 = arith.addi %5, %15 : vector<24x1xi32>
    %17 = arith.select %14, %16, %5 : vector<24x1xi1>, vector<24x1xi32>
    %c1_i32_4 = arith.constant 1 : i32
    %18 = vector.broadcast %c1_i32_4 : i32 to vector<24x1xi32>
    %19 = arith.cmpi sge, %17, %18 : vector<24x1xi32>
    %c16_i32 = arith.constant 16 : i32
    %20 = vector.broadcast %c16_i32 : i32 to vector<24x1xi32>
    %21 = arith.cmpi sle, %17, %20 : vector<24x1xi32>
    %22 = arith.andi %19, %21 : vector<24x1xi1>
    %c0_5 = arith.constant 0 : index
    %c0_6 = arith.constant 0 : index
    %c0_7 = arith.constant 0 : index
    %23 = vector.load %arg2[%c0_5, %c0_6, %c0_7] : memref<3x128x128xbf16, #tpu.memory_space<vmem>>, vector<1x128x128xbf16>
    %24 = vector.shape_cast %23 : vector<1x128x128xbf16> to vector<128x128xbf16>
    %cst = arith.constant dense<0.000000e+00> : vector<24x128xf32>
    %25 = tpu.matmul %0, %24, %cst {dimension_numbers = #tpu.dot_dimension_numbers<[1], [0], [0], [1], [0, 0, 1, 1], [], []>} : vector<24x128xbf16>, vector<128x128xbf16>, vector<24x128xf32> -> vector<24x128xf32>
    %c1 = arith.constant 1 : index
    %c0_8 = arith.constant 0 : index
    %c0_9 = arith.constant 0 : index
    %26 = vector.load %arg2[%c1, %c0_8, %c0_9] : memref<3x128x128xbf16, #tpu.memory_space<vmem>>, vector<1x128x128xbf16>
    %27 = vector.shape_cast %26 : vector<1x128x128xbf16> to vector<128x128xbf16>
    %cst_10 = arith.constant dense<0.000000e+00> : vector<24x128xf32>
    %28 = tpu.matmul %0, %27, %cst_10 {dimension_numbers = #tpu.dot_dimension_numbers<[1], [0], [0], [1], [0, 0, 1, 1], [], []>} : vector<24x128xbf16>, vector<128x128xbf16>, vector<24x128xf32> -> vector<24x128xf32>
    %c2 = arith.constant 2 : index
    %c0_11 = arith.constant 0 : index
    %c0_12 = arith.constant 0 : index
    %29 = vector.load %arg2[%c2, %c0_11, %c0_12] : memref<3x128x128xbf16, #tpu.memory_space<vmem>>, vector<1x128x128xbf16>
    %30 = vector.shape_cast %29 : vector<1x128x128xbf16> to vector<128x128xbf16>
    %cst_13 = arith.constant dense<0.000000e+00> : vector<24x128xf32>
    %31 = tpu.matmul %0, %30, %cst_13 {dimension_numbers = #tpu.dot_dimension_numbers<[1], [0], [0], [1], [0, 0, 1, 1], [], []>} : vector<24x128xbf16>, vector<128x128xbf16>, vector<24x128xf32> -> vector<24x128xf32>
    %c1_i32_14 = arith.constant 1 : i32
    %32 = tpu.dynamic_rotate %25 by %c1_i32_14 dim 0 : vector<24x128xf32>, i32 -> vector<24x128xf32>
    %33 = arith.addf %32, %28 : vector<24x128xf32>
    %c23_i32 = arith.constant 23 : i32
    %34 = tpu.dynamic_rotate %31 by %c23_i32 dim 0 : vector<24x128xf32>, i32 -> vector<24x128xf32>
    %35 = arith.addf %33, %34 : vector<24x128xf32>
    %c0_15 = arith.constant 0 : index
    %c0_16 = arith.constant 0 : index
    %36 = vector.load %arg4[%c0_15, %c0_16] : memref<1x128xf32, #tpu.memory_space<vmem>>, vector<1x128xf32>
    %37 = vector.broadcast %36 : vector<1x128xf32> to vector<24x128xf32>
    %38 = arith.addf %35, %37 : vector<24x128xf32>
    %cst_17 = arith.constant 0.000000e+00 : f32
    %39 = vector.broadcast %cst_17 : f32 to vector<24x128xf32>
    %40 = arith.maximumf %38, %39 : vector<24x128xf32>
    %cst_18 = arith.constant 0.000000e+00 : f32
    %41 = vector.shape_cast %22 : vector<24x1xi1> to vector<24x1xi1>
    %42 = vector.broadcast %41 : vector<24x1xi1> to vector<24x128xi1>
    %43 = vector.broadcast %cst_18 : f32 to vector<24x128xf32>
    %44 = arith.select %42, %40, %43 : vector<24x128xi1>, vector<24x128xf32>
    %45 = arith.truncf %44 : vector<24x128xf32> to vector<24x128xbf16>
    %c0_19 = arith.constant 0 : index
    %c0_20 = arith.constant 0 : index
    %c0_21 = arith.constant 0 : index
    %46 = vector.load %arg3[%c0_19, %c0_20, %c0_21] : memref<3x128x128xbf16, #tpu.memory_space<vmem>>, vector<1x128x128xbf16>
    %47 = vector.shape_cast %46 : vector<1x128x128xbf16> to vector<128x128xbf16>
    %cst_22 = arith.constant dense<0.000000e+00> : vector<24x128xf32>
    %48 = tpu.matmul %45, %47, %cst_22 {dimension_numbers = #tpu.dot_dimension_numbers<[1], [0], [0], [1], [0, 0, 1, 1], [], []>} : vector<24x128xbf16>, vector<128x128xbf16>, vector<24x128xf32> -> vector<24x128xf32>
    %c1_23 = arith.constant 1 : index
    %c0_24 = arith.constant 0 : index
    %c0_25 = arith.constant 0 : index
    %49 = vector.load %arg3[%c1_23, %c0_24, %c0_25] : memref<3x128x128xbf16, #tpu.memory_space<vmem>>, vector<1x128x128xbf16>
    %50 = vector.shape_cast %49 : vector<1x128x128xbf16> to vector<128x128xbf16>
    %cst_26 = arith.constant dense<0.000000e+00> : vector<24x128xf32>
    %51 = tpu.matmul %45, %50, %cst_26 {dimension_numbers = #tpu.dot_dimension_numbers<[1], [0], [0], [1], [0, 0, 1, 1], [], []>} : vector<24x128xbf16>, vector<128x128xbf16>, vector<24x128xf32> -> vector<24x128xf32>
    %c2_27 = arith.constant 2 : index
    %c0_28 = arith.constant 0 : index
    %c0_29 = arith.constant 0 : index
    %52 = vector.load %arg3[%c2_27, %c0_28, %c0_29] : memref<3x128x128xbf16, #tpu.memory_space<vmem>>, vector<1x128x128xbf16>
    %53 = vector.shape_cast %52 : vector<1x128x128xbf16> to vector<128x128xbf16>
    %cst_30 = arith.constant dense<0.000000e+00> : vector<24x128xf32>
    %54 = tpu.matmul %45, %53, %cst_30 {dimension_numbers = #tpu.dot_dimension_numbers<[1], [0], [0], [1], [0, 0, 1, 1], [], []>} : vector<24x128xbf16>, vector<128x128xbf16>, vector<24x128xf32> -> vector<24x128xf32>
    %c1_i32_31 = arith.constant 1 : i32
    %55 = tpu.dynamic_rotate %48 by %c1_i32_31 dim 0 : vector<24x128xf32>, i32 -> vector<24x128xf32>
    %56 = arith.addf %55, %51 : vector<24x128xf32>
    %c23_i32_32 = arith.constant 23 : i32
    %57 = tpu.dynamic_rotate %54 by %c23_i32_32 dim 0 : vector<24x128xf32>, i32 -> vector<24x128xf32>
    %58 = arith.addf %56, %57 : vector<24x128xf32>
    %c0_33 = arith.constant 0 : index
    %c0_34 = arith.constant 0 : index
    %59 = vector.load %arg5[%c0_33, %c0_34] : memref<1x128xf32, #tpu.memory_space<vmem>>, vector<1x128xf32>
    %60 = vector.broadcast %59 : vector<1x128xf32> to vector<24x128xf32>
    %61 = arith.addf %58, %60 : vector<24x128xf32>
    %cst_35 = arith.constant 0.000000e+00 : f32
    %62 = vector.broadcast %cst_35 : f32 to vector<24x128xf32>
    %63 = arith.maximumf %61, %62 : vector<24x128xf32>
    %64 = arith.extf %0 : vector<24x128xbf16> to vector<24x128xf32>
    %65 = arith.addf %63, %64 : vector<24x128xf32>
    %cst_36 = arith.constant 0.000000e+00 : f32
    %66 = vector.broadcast %cst_36 : f32 to vector<24x128xf32>
    %67 = arith.maximumf %65, %66 : vector<24x128xf32>
    %68 = arith.truncf %67 : vector<24x128xf32> to vector<24x128xbf16>
    %c0_37 = arith.constant 0 : index
    %c0_38 = arith.constant 0 : index
    %69 = vector.load %arg6[%c0_37, %c0_38] : memref<24x128xbf16, #tpu.memory_space<vmem>>, vector<24x128xbf16>
    tpu.vector_store %arg6[%c0_37, %c0_38], %68 {strides = array<i32>} : memref<24x128xbf16, #tpu.memory_space<vmem>>, vector<24x128xbf16>,
    return
  }
  func.func @transform_0(%arg0: i32) -> (i32, i32) {
    %c0_i32 = arith.constant 0 : i32
    %c0_i32_0 = arith.constant 0 : i32
    return %arg0, %c0_i32 : i32, i32
  }
  func.func @transform_1(%arg0: i32) -> (i32, i32, i32) {
    %c0_i32 = arith.constant 0 : i32
    %c0_i32_0 = arith.constant 0 : i32
    %c0_i32_1 = arith.constant 0 : i32
    %c0_i32_2 = arith.constant 0 : i32
    return %c0_i32, %c0_i32_0, %c0_i32_1 : i32, i32, i32
  }
  func.func @transform_2(%arg0: i32) -> (i32, i32, i32) {
    %c0_i32 = arith.constant 0 : i32
    %c0_i32_0 = arith.constant 0 : i32
    %c0_i32_1 = arith.constant 0 : i32
    %c0_i32_2 = arith.constant 0 : i32
    return %c0_i32, %c0_i32_0, %c0_i32_1 : i32, i32, i32
  }
  func.func @transform_3(%arg0: i32) -> (i32, i32) {
    %c0_i32 = arith.constant 0 : i32
    %c0_i32_0 = arith.constant 0 : i32
    %c0_i32_1 = arith.constant 0 : i32
    return %c0_i32, %c0_i32_0 : i32, i32
  }
  func.func @transform_4(%arg0: i32) -> (i32, i32) {
    %c0_i32 = arith.constant 0 : i32
    %c0_i32_0 = arith.constant 0 : i32
    %c0_i32_1 = arith.constant 0 : i32
    return %c0_i32, %c0_i32_0 : i32, i32
  }
  func.func @transform_5(%arg0: i32) -> (i32, i32) {
    %c0_i32 = arith.constant 0 : i32
    %c0_i32_0 = arith.constant 0 : i32
    return %arg0, %c0_i32 : i32, i32
  }
}

module attributes {stable_mosaic.version = 11 : i64} {
  func.func @kernel(%arg0: i32, %arg1: memref<24x128xbf16, #tpu.memory_space<vmem>>, %arg2: memref<3x128x128xbf16, #tpu.memory_space<vmem>>, %arg3: memref<3x128x128xbf16, #tpu.memory_space<vmem>>, %arg4: memref<1x128xf32, #tpu.memory_space<vmem>>, %arg5: memref<1x128xf32, #tpu.memory_space<vmem>>, %arg6: memref<24x128xbf16, #tpu.memory_space<vmem>>) attributes {dimension_semantics = [#tpu.dimension_semantics<parallel>], iteration_bounds = array<i64: 2>, scalar_prefetch = 0 : i64, scratch_operands = 0 : i64, tpu.core_type = #tpu.core_type<tc>, window_params = [{transform_indices = @transform_0, window_bounds = array<i64: 24, 128>}, {pipeline_mode = #tpu.pipeline_mode<synchronous>, transform_indices = @transform_1, window_bounds = array<i64: 3, 128, 128>}, {pipeline_mode = #tpu.pipeline_mode<synchronous>, transform_indices = @transform_2, window_bounds = array<i64: 3, 128, 128>}, {pipeline_mode = #tpu.pipeline_mode<synchronous>, transform_indices = @transform_3, window_bounds = array<i64: 1, 128>}, {pipeline_mode = #tpu.pipeline_mode<synchronous>, transform_indices = @transform_4, window_bounds = array<i64: 1, 128>}, {transform_indices = @transform_5, window_bounds = array<i64: 24, 128>}]} {
    %c0 = arith.constant 0 : index
    %c0_0 = arith.constant 0 : index
    %0 = vector.load %arg1[%c0, %c0_0] : memref<24x128xbf16, #tpu.memory_space<vmem>>, vector<24x128xbf16>
    %1 = tpu.iota {dimensions = array<i32: 0>} : vector<24x1xi32>
    %c24_i32 = arith.constant 24 : i32
    %c0_i32 = arith.constant 0 : i32
    %2 = arith.cmpi eq, %c24_i32, %c0_i32 : i32
    %c1_i32 = arith.constant 1 : i32
    %3 = arith.select %2, %c1_i32, %c24_i32 : i32
    %4 = vector.broadcast %3 : i32 to vector<24x1xi32>
    %5 = arith.remsi %1, %4 : vector<24x1xi32>
    %c0_i32_1 = arith.constant 0 : i32
    %6 = vector.broadcast %c0_i32_1 : i32 to vector<24x1xi32>
    %7 = arith.cmpi ne, %5, %6 : vector<24x1xi32>
    %c0_i32_2 = arith.constant 0 : i32
    %8 = vector.broadcast %c0_i32_2 : i32 to vector<24x1xi32>
    %9 = arith.cmpi slt, %5, %8 : vector<24x1xi32>
    %c0_i32_3 = arith.constant 0 : i32
    %10 = arith.cmpi slt, %3, %c0_i32_3 : i32
    %11 = vector.broadcast %10 : i1 to vector<24x1xi1>
    %12 = vector.broadcast %11 : vector<24x1xi1> to vector<24x1xi1>
    %13 = arith.xori %9, %12 : vector<24x1xi1>
    %14 = arith.andi %13, %7 : vector<24x1xi1>
    %15 = vector.broadcast %3 : i32 to vector<24x1xi32>
    %16 = arith.addi %5, %15 : vector<24x1xi32>
    %17 = arith.select %14, %16, %5 : vector<24x1xi1>, vector<24x1xi32>
    %c1_i32_4 = arith.constant 1 : i32
    %18 = vector.broadcast %c1_i32_4 : i32 to vector<24x1xi32>
    %19 = arith.cmpi sge, %17, %18 : vector<24x1xi32>
    %c16_i32 = arith.constant 16 : i32
    %20 = vector.broadcast %c16_i32 : i32 to vector<24x1xi32>
    %21 = arith.cmpi sle, %17, %20 : vector<24x1xi32>
    %22 = arith.andi %19, %21 : vector<24x1xi1>
    %c0_5 = arith.constant 0 : index
    %c0_6 = arith.constant 0 : index
    %c0_7 = arith.constant 0 : index
    %23 = vector.load %arg2[%c0_5, %c0_6, %c0_7] : memref<3x128x128xbf16, #tpu.memory_space<vmem>>, vector<1x128x128xbf16>
    %24 = vector.shape_cast %23 : vector<1x128x128xbf16> to vector<128x128xbf16>
    %cst = arith.constant dense<0.000000e+00> : vector<24x128xf32>
    %25 = tpu.matmul %0, %24, %cst {dimension_numbers = #tpu.dot_dimension_numbers<[1], [0], [0], [1], [0, 0, 1, 1], [], []>} : vector<24x128xbf16>, vector<128x128xbf16>, vector<24x128xf32> -> vector<24x128xf32>
    %c1 = arith.constant 1 : index
    %c0_8 = arith.constant 0 : index
    %c0_9 = arith.constant 0 : index
    %26 = vector.load %arg2[%c1, %c0_8, %c0_9] : memref<3x128x128xbf16, #tpu.memory_space<vmem>>, vector<1x128x128xbf16>
    %27 = vector.shape_cast %26 : vector<1x128x128xbf16> to vector<128x128xbf16>
    %cst_10 = arith.constant dense<0.000000e+00> : vector<24x128xf32>
    %28 = tpu.matmul %0, %27, %cst_10 {dimension_numbers = #tpu.dot_dimension_numbers<[1], [0], [0], [1], [0, 0, 1, 1], [], []>} : vector<24x128xbf16>, vector<128x128xbf16>, vector<24x128xf32> -> vector<24x128xf32>
    %c2 = arith.constant 2 : index
    %c0_11 = arith.constant 0 : index
    %c0_12 = arith.constant 0 : index
    %29 = vector.load %arg2[%c2, %c0_11, %c0_12] : memref<3x128x128xbf16, #tpu.memory_space<vmem>>, vector<1x128x128xbf16>
    %30 = vector.shape_cast %29 : vector<1x128x128xbf16> to vector<128x128xbf16>
    %cst_13 = arith.constant dense<0.000000e+00> : vector<24x128xf32>
    %31 = tpu.matmul %0, %30, %cst_13 {dimension_numbers = #tpu.dot_dimension_numbers<[1], [0], [0], [1], [0, 0, 1, 1], [], []>} : vector<24x128xbf16>, vector<128x128xbf16>, vector<24x128xf32> -> vector<24x128xf32>
    %c1_i32_14 = arith.constant 1 : i32
    %32 = tpu.dynamic_rotate %25 by %c1_i32_14 dim 0 : vector<24x128xf32>, i32 -> vector<24x128xf32>
    %33 = arith.addf %32, %28 : vector<24x128xf32>
    %c23_i32 = arith.constant 23 : i32
    %34 = tpu.dynamic_rotate %31 by %c23_i32 dim 0 : vector<24x128xf32>, i32 -> vector<24x128xf32>
    %35 = arith.addf %33, %34 : vector<24x128xf32>
    %c0_15 = arith.constant 0 : index
    %c0_16 = arith.constant 0 : index
    %36 = vector.load %arg4[%c0_15, %c0_16] : memref<1x128xf32, #tpu.memory_space<vmem>>, vector<1x128xf32>
    %37 = vector.broadcast %36 : vector<1x128xf32> to vector<24x128xf32>
    %38 = arith.addf %35, %37 : vector<24x128xf32>
    %cst_17 = arith.constant 0.000000e+00 : f32
    %39 = vector.broadcast %cst_17 : f32 to vector<24x128xf32>
    %40 = arith.maximumf %38, %39 : vector<24x128xf32>
    %cst_18 = arith.constant 0.000000e+00 : f32
    %41 = vector.shape_cast %22 : vector<24x1xi1> to vector<24x1xi1>
    %42 = vector.broadcast %41 : vector<24x1xi1> to vector<24x128xi1>
    %43 = vector.broadcast %cst_18 : f32 to vector<24x128xf32>
    %44 = arith.select %42, %40, %43 : vector<24x128xi1>, vector<24x128xf32>
    %45 = arith.truncf %44 : vector<24x128xf32> to vector<24x128xbf16>
    %c0_19 = arith.constant 0 : index
    %c0_20 = arith.constant 0 : index
    %c0_21 = arith.constant 0 : index
    %46 = vector.load %arg3[%c0_19, %c0_20, %c0_21] : memref<3x128x128xbf16, #tpu.memory_space<vmem>>, vector<1x128x128xbf16>
    %47 = vector.shape_cast %46 : vector<1x128x128xbf16> to vector<128x128xbf16>
    %cst_22 = arith.constant dense<0.000000e+00> : vector<24x128xf32>
    %48 = tpu.matmul %45, %47, %cst_22 {dimension_numbers = #tpu.dot_dimension_numbers<[1], [0], [0], [1], [0, 0, 1, 1], [], []>} : vector<24x128xbf16>, vector<128x128xbf16>, vector<24x128xf32> -> vector<24x128xf32>
    %c1_23 = arith.constant 1 : index
    %c0_24 = arith.constant 0 : index
    %c0_25 = arith.constant 0 : index
    %49 = vector.load %arg3[%c1_23, %c0_24, %c0_25] : memref<3x128x128xbf16, #tpu.memory_space<vmem>>, vector<1x128x128xbf16>
    %50 = vector.shape_cast %49 : vector<1x128x128xbf16> to vector<128x128xbf16>
    %cst_26 = arith.constant dense<0.000000e+00> : vector<24x128xf32>
    %51 = tpu.matmul %45, %50, %cst_26 {dimension_numbers = #tpu.dot_dimension_numbers<[1], [0], [0], [1], [0, 0, 1, 1], [], []>} : vector<24x128xbf16>, vector<128x128xbf16>, vector<24x128xf32> -> vector<24x128xf32>
    %c2_27 = arith.constant 2 : index
    %c0_28 = arith.constant 0 : index
    %c0_29 = arith.constant 0 : index
    %52 = vector.load %arg3[%c2_27, %c0_28, %c0_29] : memref<3x128x128xbf16, #tpu.memory_space<vmem>>, vector<1x128x128xbf16>
    %53 = vector.shape_cast %52 : vector<1x128x128xbf16> to vector<128x128xbf16>
    %cst_30 = arith.constant dense<0.000000e+00> : vector<24x128xf32>
    %54 = tpu.matmul %45, %53, %cst_30 {dimension_numbers = #tpu.dot_dimension_numbers<[1], [0], [0], [1], [0, 0, 1, 1], [], []>} : vector<24x128xbf16>, vector<128x128xbf16>, vector<24x128xf32> -> vector<24x128xf32>
    %c1_i32_31 = arith.constant 1 : i32
    %55 = tpu.dynamic_rotate %48 by %c1_i32_31 dim 0 : vector<24x128xf32>, i32 -> vector<24x128xf32>
    %56 = arith.addf %55, %51 : vector<24x128xf32>
    %c23_i32_32 = arith.constant 23 : i32
    %57 = tpu.dynamic_rotate %54 by %c23_i32_32 dim 0 : vector<24x128xf32>, i32 -> vector<24x128xf32>
    %58 = arith.addf %56, %57 : vector<24x128xf32>
    %c0_33 = arith.constant 0 : index
    %c0_34 = arith.constant 0 : index
    %59 = vector.load %arg5[%c0_33, %c0_34] : memref<1x128xf32, #tpu.memory_space<vmem>>, vector<1x128xf32>
    %60 = vector.broadcast %59 : vector<1x128xf32> to vector<24x128xf32>
    %61 = arith.addf %58, %60 : vector<24x128xf32>
    %cst_35 = arith.constant 0.000000e+00 : f32
    %62 = vector.broadcast %cst_35 : f32 to vector<24x128xf32>
    %63 = arith.maximumf %61, %62 : vector<24x128xf32>
    %64 = arith.extf %0 : vector<24x128xbf16> to vector<24x128xf32>
    %65 = arith.addf %63, %64 : vector<24x128xf32>
    %cst_36 = arith.constant 0.000000e+00 : f32
    %66 = vector.broadcast %cst_36 : f32 to vector<24x128xf32>
    %67 = arith.maximumf %65, %66 : vector<24x128xf32>
    %68 = arith.truncf %67 : vector<24x128xf32> to vector<24x128xbf16>
    %c0_37 = arith.constant 0 : index
    %c0_38 = arith.constant 0 : index
    %69 = vector.load %arg6[%c0_37, %c0_38] : memref<24x128xbf16, #tpu.memory_space<vmem>>, vector<24x128xbf16>
    tpu.vector_store %arg6[%c0_37, %c0_38], %68 {strides = array<i32>} : memref<24x128xbf16, #tpu.memory_space<vmem>>, vector<24x128xbf16>,
    return
  }
  func.func @transform_0(%arg0: i32) -> (i32, i32) {
    %c0_i32 = arith.constant 0 : i32
    %c0_i32_0 = arith.constant 0 : i32
    return %arg0, %c0_i32 : i32, i32
  }
  func.func @transform_1(%arg0: i32) -> (i32, i32, i32) {
    %c0_i32 = arith.constant 0 : i32
    %c0_i32_0 = arith.constant 0 : i32
    %c0_i32_1 = arith.constant 0 : i32
    %c0_i32_2 = arith.constant 0 : i32
    return %c0_i32, %c0_i32_0, %c0_i32_1 : i32, i32, i32
  }
  func.func @transform_2(%arg0: i32) -> (i32, i32, i32) {
    %c0_i32 = arith.constant 0 : i32
    %c0_i32_0 = arith.constant 0 : i32
    %c0_i32_1 = arith.constant 0 : i32
    %c0_i32_2 = arith.constant 0 : i32
    return %c0_i32, %c0_i32_0, %c0_i32_1 : i32, i32, i32
  }
  func.func @transform_3(%arg0: i32) -> (i32, i32) {
    %c0_i32 = arith.constant 0 : i32
    %c0_i32_0 = arith.constant 0 : i32
    %c0_i32_1 = arith.constant 0 : i32
    return %c0_i32, %c0_i32_0 : i32, i32
  }
  func.func @transform_4(%arg0: i32) -> (i32, i32) {
    %c0_i32 = arith.constant 0 : i32
    %c0_i32_0 = arith.constant 0 : i32
    %c0_i32_1 = arith.constant 0 : i32
    return %c0_i32, %c0_i32_0 : i32, i32
  }
  func.func @transform_5(%arg0: i32) -> (i32, i32) {
    %c0_i32 = arith.constant 0 : i32
    %c0_i32_0 = arith.constant 0 : i32
    return %arg0, %c0_i32 : i32, i32
  }
}

</mosaic_0001>

<llo_original>
// kernel: tpu_custom_call.1
$region0: #{tpu_custom_call.1}
  #allocation0 [shape = 'u32[]', space=smem, size = 0x4, offset = 0x4, fixed_abs, tag = 'smem constant byte address 0x4 - core index']
  #allocation1 [shape = 'u32[144,128]{1,0:T(1,128)}', space=vmem, size = 0x12000, scoped, tag = 'internal scratch']
  %s0 = inlined_call_operand.hbm [shape: bf16[48,128], index: 0, kind: input, shape index: {}]
  %s1 = inlined_call_operand.hbm [shape: bf16[3,128,128], index: 1, kind: input, shape index: {}]
  %s2 = inlined_call_operand.hbm [shape: bf16[3,128,128], index: 2, kind: input, shape index: {}]
  %s3 = inlined_call_operand.vmem [shape: f32[1,128], index: 3, kind: input, shape index: {}]
  %s4 = inlined_call_operand.vmem [shape: f32[1,128], index: 4, kind: input, shape index: {}]
  %s5 = inlined_call_operand.hbm [shape: bf16[48,128], index: 5, kind: output, shape index: {}]
  %s6 = sld [smem:[#allocation0]]
  $region65: #{tpu_custom_call.1} parent=0
    _
  %s8 = ssub.s32 1, %s6
  %s9 = scalar_select 0, %s8, %s6
  $region1: #{tpu_custom_call.1} parent=0
    #allocation2 [shape = 'u8[12288]{0}', space=vmem, size = 0x3000, scoped, tag = 'input window, operand 0']
    #allocation3 [shape = 's32[2]{0}', space=sflag, size = 0x8, scoped, tag = 'scoped memory for tpu_custom_call.1']
    #allocation4 [shape = 's32[2]{0}', space=sflag, size = 0x8, scoped, tag = 'scoped memory for tpu_custom_call.1']
    #allocation5 [shape = 'u8[98304]{0}', space=vmem, size = 0x18000, scoped, tag = 'input window, operand 1, single buffered']
    #allocation6 [shape = 's32[1]{0}', space=sflag, size = 0x4, scoped, tag = 'scoped memory for tpu_custom_call.1']
    #allocation7 [shape = 'u8[98304]{0}', space=vmem, size = 0x18000, scoped, tag = 'input window, operand 2, single buffered']
    #allocation8 [shape = 'u8[12288]{0}', space=vmem, size = 0x3000, scoped, tag = 'output window, operand 0']
    %10 = vsyncpa [#allocation3], 0
    %s11 = scalar_lea.sflag [#allocation3], 1
    %12 = vsyncpa %s11, 0
    %13 = vsyncpa [#allocation6], 0
    %14 = vsyncpa [#allocation4], 0
    %s15 = scalar_lea.sflag [#allocation4], 1
    %16 = vsyncpa %s15, 0
    loop: start=0, step=1, limit=4
    $region2: #{tpu_custom_call.1} parent=1 // loop_pre_header
      _
    $region3: #{tpu_custom_call.1} parent=1 // loop_header
      %s18 = sphi 0, %s22
      %p19 = scmp.ge.s32.totalorder %s18, 4
      %s28 = sphi 0, %s30
      %s31 = sphi 0, %s28
      %s32 = sphi 0, %s31
      %s48 = sphi 0, %s32
      %s52 = sphi 0, %s52
      %s54 = sphi 0, %s52
      %s55 = sphi 0, %s54
      %s69 = sphi 0, %s55
      %s73 = sphi 0, %s73
      %s75 = sphi 0, %s73
      %s76 = sphi 0, %s75
      %s90 = sphi 0, %s76
      %s94 = sphi 0, %s94
      %s96 = sphi 0, %s94
      %s97 = sphi 0, %s96
      %s111 = sphi 0, %s97
      %s115 = sphi 0, %s115
      %s117 = sphi 0, %s115
      %s118 = sphi 0, %s117
      %s132 = sphi 0, %s118
      %s138 = sphi 0, %s140
      %s141 = sphi 0, %s138
      %s142 = sphi 0, %s141
      %s158 = sphi 0, %s142
    $region4: #{tpu_custom_call.1} parent=1 // loop_header_branch
      %21 = sbr.rel (%p19) target = $region8
    $region5: #{tpu_custom_call.1} parent=1 // loop_body
      %s23 = ssub.s32 %s18, 1
      %s24 = ssub.s32 %s18, 2
      %s25 = sadd.s32 %s18, 1
      %s26 = ssub.s32 %s18, %s25
      %p27 = scmp.eq.s32.totalorder %s26, 0
      %s29 = sadd.s32 %s28, 1
      %s30 = scalar_select %p27, %s28, %s29
      %p33 = pneg %p27
      %p34 = scmp.eq.s32.totalorder %s18, 1
      %p35 = por %p33, %p34
      %p36 = scmp.ne.s32.totalorder %s28, %s31
      %p37 = scmp.eq.s32.totalorder %s18, 0
      %p38 = por %p36, %p37
      %p39 = scmp.ne.s32.totalorder %s28, %s31
      %p40 = scmp.eq.s32.totalorder %s23, 1
      %p41 = por %p39, %p40
      %p42 = scmp.ne.s32.totalorder %s31, %s32
      %p43 = scmp.eq.s32.totalorder %s23, 0
      %p44 = por %p42, %p43
      %p45 = scmp.ne.s32.totalorder %s31, %s32
      %p46 = scmp.eq.s32.totalorder %s24, 1
      %p47 = por %p45, %p46
      %p49 = scmp.ne.s32.totalorder %s32, %s48
      %p50 = scmp.eq.s32.totalorder %s24, 0
      %p51 = por %p49, %p50
      %s53 = sadd.s32 %s52, 1
      %p56 = scmp.eq.s32.totalorder %s18, 1
      %p57 = scmp.ne.s32.totalorder %s52, %s54
      %p58 = scmp.eq.s32.totalorder %s18, 0
      %p59 = por %p57, %p58
      %p60 = scmp.ne.s32.totalorder %s52, %s54
      %p61 = scmp.eq.s32.totalorder %s23, 1
      %p62 = por %p60, %p61
      %p63 = scmp.ne.s32.totalorder %s54, %s55
      %p64 = scmp.eq.s32.totalorder %s23, 0
      %p65 = por %p63, %p64
      %p66 = scmp.ne.s32.totalorder %s54, %s55
      %p67 = scmp.eq.s32.totalorder %s24, 1
      %p68 = por %p66, %p67
      %p70 = scmp.ne.s32.totalorder %s55, %s69
      %p71 = scmp.eq.s32.totalorder %s24, 0
      %p72 = por %p70, %p71
      %s74 = sadd.s32 %s73, 1
      %p77 = scmp.eq.s32.totalorder %s18, 1
      %p78 = scmp.ne.s32.totalorder %s73, %s75
      %p79 = scmp.eq.s32.totalorder %s18, 0
      %p80 = por %p78, %p79
      %p81 = scmp.ne.s32.totalorder %s73, %s75
      %p82 = scmp.eq.s32.totalorder %s23, 1
      %p83 = por %p81, %p82
      %p84 = scmp.ne.s32.totalorder %s75, %s76
      %p85 = scmp.eq.s32.totalorder %s23, 0
      %p86 = por %p84, %p85
      %p87 = scmp.ne.s32.totalorder %s75, %s76
      %p88 = scmp.eq.s32.totalorder %s24, 1
      %p89 = por %p87, %p88
      %p91 = scmp.ne.s32.totalorder %s76, %s90
      %p92 = scmp.eq.s32.totalorder %s24, 0
      %p93 = por %p91, %p92
      %s95 = sadd.s32 %s94, 1
      %p98 = scmp.eq.s32.totalorder %s18, 1
      %p99 = scmp.ne.s32.totalorder %s94, %s96
      %p100 = scmp.eq.s32.totalorder %s18, 0
      %p101 = por %p99, %p100
      %p102 = scmp.ne.s32.totalorder %s94, %s96
      %p103 = scmp.eq.s32.totalorder %s23, 1
      %p104 = por %p102, %p103
      %p105 = scmp.ne.s32.totalorder %s96, %s97
      %p106 = scmp.eq.s32.totalorder %s23, 0
      %p107 = por %p105, %p106
      %p108 = scmp.ne.s32.totalorder %s96, %s97
      %p109 = scmp.eq.s32.totalorder %s24, 1
      %p110 = por %p108, %p109
      %p112 = scmp.ne.s32.totalorder %s97, %s111
      %p113 = scmp.eq.s32.totalorder %s24, 0
      %p114 = por %p112, %p113
      %s116 = sadd.s32 %s115, 1
      %p119 = scmp.eq.s32.totalorder %s18, 1
      %p120 = scmp.ne.s32.totalorder %s115, %s117
      %p121 = scmp.eq.s32.totalorder %s18, 0
      %p122 = por %p120, %p121
      %p123 = scmp.ne.s32.totalorder %s115, %s117
      %p124 = scmp.eq.s32.totalorder %s23, 1
      %p125 = por %p123, %p124
      %p126 = scmp.ne.s32.totalorder %s117, %s118
      %p127 = scmp.eq.s32.totalorder %s23, 0
      %p128 = por %p126, %p127
      %p129 = scmp.ne.s32.totalorder %s117, %s118
      %p130 = scmp.eq.s32.totalorder %s24, 1
      %p131 = por %p129, %p130
      %p133 = scmp.ne.s32.totalorder %s118, %s132
      %p134 = scmp.eq.s32.totalorder %s24, 0
      %p135 = por %p133, %p134
      %s136 = ssub.s32 %s18, %s25
      %p137 = scmp.eq.s32.totalorder %s136, 0
      %s139 = sadd.s32 %s138, 1
      %s140 = scalar_select %p137, %s138, %s139
      %p143 = pneg %p137
      %p144 = scmp.eq.s32.totalorder %s18, 1
      %p145 = por %p143, %p144
      %p146 = scmp.ne.s32.totalorder %s138, %s141
      %p147 = scmp.eq.s32.totalorder %s18, 0
      %p148 = por %p146, %p147
      %p149 = scmp.ne.s32.totalorder %s138, %s141
      %p150 = scmp.eq.s32.totalorder %s23, 1
      %p151 = por %p149, %p150
      %p152 = scmp.ne.s32.totalorder %s141, %s142
      %p153 = scmp.eq.s32.totalorder %s23, 0
      %p154 = por %p152, %p153
      %p155 = scmp.ne.s32.totalorder %s141, %s142
      %p156 = scmp.eq.s32.totalorder %s24, 1
      %p157 = por %p155, %p156
      %p159 = scmp.ne.s32.totalorder %s142, %s158
      %p160 = scmp.eq.s32.totalorder %s24, 0
      %p161 = por %p159, %p160
      %p162 = scmp.le.s32.totalorder 1, %s18
      %p163 = scmp.lt.s32.totalorder %s18, 3
      %p164 = pnand %p162, %p163
      %p165 = pneg %p164
      // Predicated region
      $region9: #{tpu_custom_call.1} parent=5 // pred_check
        _
      $region10: #{tpu_custom_call.1} parent=5 // pred_check_branch
        %167 = sbr.rel (%p164) target = $region12
      $region11: #{tpu_custom_call.1} parent=5 // pred_region
        %s168 = ssub.s32 %s18, 1
        // Predicated region
        $region13: #{tpu_custom_call.1} parent=11 // pred_check
          %p169 = pneg %p65
        $region14: #{tpu_custom_call.1} parent=11 // pred_check_branch
          %171 = sbr.rel (%p169) target = $region16
        $region15: #{tpu_custom_call.1} parent=11 // pred_region
          %s173 = ssub.s32 3072, 3072
          %174 = vsyncadd [#allocation6], %s173
          %s175 = sshll.u32 [#allocation5], 4
          %s176 = int_to_ptr.vmem [resolvable:$true] %s175
          %181 = dma.hbm_to_vmem [thread:$0]  %s1, 3072, %s176, [#allocation6], 64, 64, 4
        $region16: #{tpu_custom_call.1} parent=11 // pred_fallthru
          _
        // Predicated region
        $region17: #{tpu_custom_call.1} parent=11 // pred_check
          %p182 = pneg %p86
        $region18: #{tpu_custom_call.1} parent=11 // pred_check_branch
          %184 = sbr.rel (%p182) target = $region20
        $region19: #{tpu_custom_call.1} parent=11 // pred_region
          %s186 = ssub.s32 3072, 3072
          %187 = vsyncadd [#allocation6], %s186
          %s188 = sshll.u32 [#allocation7], 4
          %s189 = int_to_ptr.vmem [resolvable:$true] %s188
          %194 = dma.hbm_to_vmem [thread:$0]  %s2, 3072, %s189, [#allocation6], 64, 64, 4
        $region20: #{tpu_custom_call.1} parent=11 // pred_fallthru
          _
        // Predicated region
        $region21: #{tpu_custom_call.1} parent=11 // pred_check
          %p195 = pneg %p107
        $region22: #{tpu_custom_call.1} parent=11 // pred_check_branch
          %197 = sbr.rel (%p195) target = $region24
        $region23: #{tpu_custom_call.1} parent=11 // pred_region
          _
        $region24: #{tpu_custom_call.1} parent=11 // pred_fallthru
          _
        // Predicated region
        $region25: #{tpu_custom_call.1} parent=11 // pred_check
          %p198 = pneg %p128
        $region26: #{tpu_custom_call.1} parent=11 // pred_check_branch
          %200 = sbr.rel (%p198) target = $region28
        $region27: #{tpu_custom_call.1} parent=11 // pred_region
          _
        $region28: #{tpu_custom_call.1} parent=11 // pred_fallthru
          _
      $region12: #{tpu_custom_call.1} parent=5 // pred_fallthru
        _
      %p201 = scmp.lt.s32.totalorder %s18, 2
      // Predicated region
      $region29: #{tpu_custom_call.1} parent=5 // pred_check
        %p202 = pneg %p201
      $region30: #{tpu_custom_call.1} parent=5 // pred_check_branch
        %204 = sbr.rel (%p202) target = $region32
      $region31: #{tpu_custom_call.1} parent=5 // pred_region
        // Predicated region
        $region33: #{tpu_custom_call.1} parent=31 // pred_check
          %p205 = pneg %p38
        $region34: #{tpu_custom_call.1} parent=31 // pred_check_branch
          %207 = sbr.rel (%p205) target = $region36
        $region35: #{tpu_custom_call.1} parent=31 // pred_region
          %s208 = sand.u32 %s28, 1
          %s209 = scalar_lea.sflag [#allocation3], %s208
          %s210 = sand.u32 %s28, 1
          %s211 = smul.addr %s210, 12
          %s212 = scalar_lea.vmem [#allocation2], %s211
          %s213 = smul.u32 3, %s18
          %s215 = ssub.s32 192, 192
          %216 = vsyncadd %s209, %s215
          %s217 = smul.addr %s213, 64
          %s218 = scalar_lea.hbm %s0, %s217
          %s219 = sshll.u32 %s212, 4
          %s220 = int_to_ptr.vmem [resolvable:$true] %s219
          %225 = dma.hbm_to_vmem [thread:$0]  %s218, 192, %s220, %s209, 64, 64, 4
        $region36: #{tpu_custom_call.1} parent=31 // pred_fallthru
          _
      $region32: #{tpu_custom_call.1} parent=5 // pred_fallthru
        _
      %p226 = scmp.le.s32.totalorder 1, %s18
      %p227 = scmp.lt.s32.totalorder %s18, 3
      %p228 = pnand %p226, %p227
      %p229 = pneg %p228
      // Predicated region
      $region37: #{tpu_custom_call.1} parent=5 // pred_check
        _
      $region38: #{tpu_custom_call.1} parent=5 // pred_check_branch
        %231 = sbr.rel (%p228) target = $region40
      $region39: #{tpu_custom_call.1} parent=5 // pred_region
        %s232 = ssub.s32 %s18, 1
        %s233 = sand.u32 %s31, 1
        %s234 = scalar_lea.sflag [#allocation3], %s233
        %s235 = sand.u32 %s31, 1
        %s236 = smul.addr %s235, 12
        %s237 = scalar_lea.vmem [#allocation2], %s236
        // Predicated region
        $region41: #{tpu_custom_call.1} parent=39 // pred_check
          %p238 = pneg %p44
        $region42: #{tpu_custom_call.1} parent=39 // pred_check_branch
          %240 = sbr.rel (%p238) target = $region44
        $region43: #{tpu_custom_call.1} parent=39 // pred_region
          %241 = dma.done %s234, 192
        $region44: #{tpu_custom_call.1} parent=39 // pred_fallthru
          _
        // Predicated region
        $region45: #{tpu_custom_call.1} parent=39 // pred_check
          %p242 = pneg %p65
        $region46: #{tpu_custom_call.1} parent=39 // pred_check_branch
          %244 = sbr.rel (%p242) target = $region48
        $region47: #{tpu_custom_call.1} parent=39 // pred_region
          %245 = dma.done [#allocation6], 3072
        $region48: #{tpu_custom_call.1} parent=39 // pred_fallthru
          _
        // Predicated region
        $region49: #{tpu_custom_call.1} parent=39 // pred_check
          %p246 = pneg %p86
        $region50: #{tpu_custom_call.1} parent=39 // pred_check_branch
          %248 = sbr.rel (%p246) target = $region52
        $region51: #{tpu_custom_call.1} parent=39 // pred_region
          %249 = dma.done [#allocation6], 3072
        $region52: #{tpu_custom_call.1} parent=39 // pred_fallthru
          _
        %s250 = sand.u32 %s31, 1
        %s251 = scalar_lea.sflag [#allocation3], %s250
        %s252 = sand.u32 %s31, 1
        %s253 = smul.addr %s252, 12
        %s254 = scalar_lea.vmem [#allocation2], %s253
        %p255 = pneg %p44
        %p256 = pneg %p41
        %p257 = pneg %p65
        %p258 = pneg %p62
        %p259 = pneg %p86
        %p260 = pneg %p83
        %p261 = pneg %p107
        %p262 = pneg %p104
        %p263 = pneg %p128
        %p264 = pneg %p125
        %p265 = pneg %p154
        %p266 = pneg %p151
        %s267 = sand.u32 %s141, 1
        %s268 = scalar_lea.sflag [#allocation4], %s267
        %s269 = sand.u32 %s141, 1
        %s270 = smul.addr %s269, 12
        %s271 = scalar_lea.vmem [#allocation8], %s270
        %s272 = smul.u32 3, %s23
        %s273 = smul.u32 3, %s23
        %v275 = vld [vmem:[%s237] sm:$0xf]
        %v276 = vld [vmem:[%s237 + $0x4] sm:$0xf]
        %v277 = vld [vmem:[%s237 + $0x8] sm:$0xf]
        %v278 = vlaneseq
        %v279 = vshrl.u32 %v278, 7
        %v280 = vadd.s32 %v279, 8
        %v281 = vadd.s32 %v279, 16
        %vm282 = vcmp.lt.s32.totalorder %v279, 0
        %v283 = vsub.s32 0, %v279
        %v284 = vsel %vm282, %v283, %v279
        %v285 = vmul.u32.u64.compose %v284, 2863311531
        %v286 = vextract.low.u32 %v285
        %v287 = vextract.high.u32 %v285
        %v288 = vshrl.u32 %v287, 4
        %v289 = vmul.u32 %v288, 24
        %v290 = vsub.s32 %v284, %v289
        %v291 = vsub.s32 0, %v290
        %v292 = vsel %vm282, %v291, %v290
        %vm293 = vcmp.lt.s32.totalorder %v280, 0
        %v294 = vsub.s32 0, %v280
        %v295 = vsel %vm293, %v294, %v280
        %v296 = vmul.u32.u64.compose %v295, 2863311531
        %v297 = vextract.low.u32 %v296
        %v298 = vextract.high.u32 %v296
        %v299 = vshrl.u32 %v298, 4
        %v300 = vmul.u32 %v299, 24
        %v301 = vsub.s32 %v295, %v300
        %v302 = vsub.s32 0, %v301
        %v303 = vsel %vm293, %v302, %v301
        %vm304 = vcmp.lt.s32.totalorder %v281, 0
        %v305 = vsub.s32 0, %v281
        %v306 = vsel %vm304, %v305, %v281
        %v307 = vmul.u32.u64.compose %v306, 2863311531
        %v308 = vextract.low.u32 %v307
        %v309 = vextract.high.u32 %v307
        %v310 = vshrl.u32 %v309, 4
        %v311 = vmul.u32 %v310, 24
        %v312 = vsub.s32 %v306, %v311
        %v313 = vsub.s32 0, %v312
        %v314 = vsel %vm304, %v313, %v312
        %vm315 = vcmp.ne.s32.totalorder %v292, 0
        %vm316 = vcmp.ne.s32.totalorder %v303, 0
        %vm317 = vcmp.ne.s32.totalorder %v314, 0
        %vm318 = vcmp.lt.s32.totalorder %v292, 0
        %vm319 = vcmp.lt.s32.totalorder %v303, 0
        %vm320 = vcmp.lt.s32.totalorder %v314, 0
        %vm321 = vmand %vm318, %vm315
        %vm322 = vmand %vm319, %vm316
        %vm323 = vmand %vm320, %vm317
        %v324 = vadd.s32 %v292, 24
        %v325 = vadd.s32 %v303, 24
        %v326 = vadd.s32 %v314, 24
        %v327 = vsel %vm321, %v324, %v292
        %v328 = vsel %vm322, %v325, %v303
        %v329 = vsel %vm323, %v326, %v314
        %vm330 = vcmp.ge.s32.totalorder %v327, 1
        %vm331 = vcmp.ge.s32.totalorder %v328, 1
        %vm332 = vcmp.ge.s32.totalorder %v329, 1
        %vm333 = vcmp.le.s32.totalorder %v327, 16
        %vm334 = vcmp.le.s32.totalorder %v328, 16
        %vm335 = vcmp.le.s32.totalorder %v329, 16
        %vm336 = vmand %vm330, %vm333
        %vm337 = vmand %vm331, %vm334
        %vm338 = vmand %vm332, %vm335
        %v339 = vld [vmem:[#allocation5] sm:$0xf]
        %v340 = vld [vmem:[#allocation5 + $0x4] sm:$0xf]
        %v341 = vld [vmem:[#allocation5 + $0x8] sm:$0xf]
        %v342 = vld [vmem:[#allocation5 + $0xc] sm:$0xf]
        %v343 = vld [vmem:[#allocation5 + $0x10] sm:$0xf]
        %v344 = vld [vmem:[#allocation5 + $0x14] sm:$0xf]
        %v345 = vld [vmem:[#allocation5 + $0x18] sm:$0xf]
        %v346 = vld [vmem:[#allocation5 + $0x1c] sm:$0xf]
        %v347 = vld [vmem:[#allocation5 + $0x20] sm:$0xf]
        %v348 = vld [vmem:[#allocation5 + $0x24] sm:$0xf]
        %v349 = vld [vmem:[#allocation5 + $0x28] sm:$0xf]
        %v350 = vld [vmem:[#allocation5 + $0x2c] sm:$0xf]
        %v351 = vld [vmem:[#allocation5 + $0x30] sm:$0xf]
        %v352 = vld [vmem:[#allocation5 + $0x34] sm:$0xf]
        %v353 = vld [vmem:[#allocation5 + $0x38] sm:$0xf]
        %v354 = vld [vmem:[#allocation5 + $0x3c] sm:$0xf]
        %v358 = vunpack.c.l.b16 %v275
        %v359 = vunpack.c.l.b16 %v276
        %v360 = vunpack.c.l.b16 %v277
        %v361 = vpack.c.b16 %v359, %v358
        %v362 = vpack.c.b16 %v360, %v360
        %v381 = vunpack.c.l.b16 %v339
        %v382 = vunpack.c.l.b16 %v340
        %v383 = vunpack.c.l.b16 %v341
        %v384 = vunpack.c.l.b16 %v342
        %v385 = vunpack.c.l.b16 %v343
        %v386 = vunpack.c.l.b16 %v344
        %v387 = vunpack.c.l.b16 %v345
        %v388 = vunpack.c.l.b16 %v346
        %v389 = vunpack.c.l.b16 %v347
        %v390 = vunpack.c.l.b16 %v348
        %v391 = vunpack.c.l.b16 %v349
        %v392 = vunpack.c.l.b16 %v350
        %v393 = vunpack.c.l.b16 %v351
        %v394 = vunpack.c.l.b16 %v352
        %v395 = vunpack.c.l.b16 %v353
        %v396 = vunpack.c.l.b16 %v354
        %v397 = vpack.c.b16 %v382, %v381
        %v398 = vpack.c.b16 %v384, %v383
        %v399 = vpack.c.b16 %v386, %v385
        %v400 = vpack.c.b16 %v388, %v387
        %v401 = vpack.c.b16 %v390, %v389
        %v402 = vpack.c.b16 %v392, %v391
        %v403 = vpack.c.b16 %v394, %v393
        %v404 = vpack.c.b16 %v396, %v395
        %413 = vmatprep.subr.bf16.mxu0 0
        %414 = vmatpush1.bf16.msra.mxu0 %v404
        %415 = vmatprep.subr.bf16.mxu0 0
        %416 = vmatpush1.bf16.msra.mxu0 %v403
        %417 = vmatprep.subr.bf16.mxu0 0
        %418 = vmatpush1.bf16.msra.mxu0 %v402
        %419 = vmatprep.subr.bf16.mxu0 0
        %420 = vmatpush1.bf16.msra.mxu0 %v401
        %421 = vmatprep.subr.bf16.mxu0 0
        %422 = vmatpush1.bf16.msra.mxu0 %v400
        %423 = vmatprep.subr.bf16.mxu0 0
        %424 = vmatpush1.bf16.msra.mxu0 %v399
        %425 = vmatprep.subr.bf16.mxu0 0
        %426 = vmatpush1.bf16.msra.mxu0 %v398
        %427 = vmatprep.subr.bf16.mxu0 0
        %428 = vmatpush1.bf16.msra.mxu0 %v397
        %429 = vmatprep.subr.bf16.mxu0 0
        %430 = vmatpush2.bf16.msra.mxu0 0
        %431 = vmatprep.subr.bf16.mxu0 0
        %432 = vmatpush2.bf16.msra.mxu0 0
        %433 = vmatprep.subr.bf16.mxu0 0
        %434 = vmatpush2.bf16.msra.mxu0 0
        %435 = vmatprep.subr.bf16.mxu0 0
        %436 = vmatpush2.bf16.msra.mxu0 0
        %437 = vmatprep.subr.bf16.mxu0 0
        %438 = vmatpush2.bf16.msra.mxu0 0
        %439 = vmatprep.subr.bf16.mxu0 0
        %440 = vmatpush2.bf16.msra.mxu0 0
        %441 = vmatprep.subr.bf16.mxu0 0
        %442 = vmatpush2.bf16.msra.mxu0 0
        %443 = vmatprep.subr.bf16.mxu0 0
        %444 = vmatpush2.bf16.msra.mxu0 0
        %445 = vmatprep.mubr.bf16.mxu0 0
        %446 = vmatmul.mubr.bf16.gmra.mxu0 %v361
        %v447 = vpop.f32.mrf.mxu0
        %v448 = vadd.f32 0.0, %v447
        %v449 = vpop.f32.mrf.mxu0
        %v450 = vpop.f32.mrf.mxu0
        %v451 = vadd.f32 0.0, %v450
        %v452 = vpop.f32.mrf.mxu0
        %453 = vmatprep.mubr.bf16.mxu0 0
        %454 = vmatmul.mubr.bf16.gmra.mxu0 %v362
        %v455 = vpop.f32.mrf.mxu0
        %v456 = vadd.f32 0.0, %v455
        %v457 = vpop.f32.mrf.mxu0
        %v458 = vpop.f32.mrf.mxu0
        %v459 = vpop.f32.mrf.mxu0
        %460 = vdwg.mxu0
        %s461 = scalar_lea.vmem [#allocation5], 64
        %v462 = vld [vmem:[%s461] sm:$0xf]
        %v463 = vld [vmem:[%s461 + $0x4] sm:$0xf]
        %v464 = vld [vmem:[%s461 + $0x8] sm:$0xf]
        %v465 = vld [vmem:[%s461 + $0xc] sm:$0xf]
        %v466 = vld [vmem:[%s461 + $0x10] sm:$0xf]
        %v467 = vld [vmem:[%s461 + $0x14] sm:$0xf]
        %v468 = vld [vmem:[%s461 + $0x18] sm:$0xf]
        %v469 = vld [vmem:[%s461 + $0x1c] sm:$0xf]
        %v470 = vld [vmem:[%s461 + $0x20] sm:$0xf]
        %v471 = vld [vmem:[%s461 + $0x24] sm:$0xf]
        %v472 = vld [vmem:[%s461 + $0x28] sm:$0xf]
        %v473 = vld [vmem:[%s461 + $0x2c] sm:$0xf]
        %v474 = vld [vmem:[%s461 + $0x30] sm:$0xf]
        %v475 = vld [vmem:[%s461 + $0x34] sm:$0xf]
        %v476 = vld [vmem:[%s461 + $0x38] sm:$0xf]
        %v477 = vld [vmem:[%s461 + $0x3c] sm:$0xf]
        %v494 = vunpack.c.l.b16 %v462
        %v495 = vunpack.c.l.b16 %v463
        %v496 = vunpack.c.l.b16 %v464
        %v497 = vunpack.c.l.b16 %v465
        %v498 = vunpack.c.l.b16 %v466
        %v499 = vunpack.c.l.b16 %v467
        %v500 = vunpack.c.l.b16 %v468
        %v501 = vunpack.c.l.b16 %v469
        %v502 = vunpack.c.l.b16 %v470
        %v503 = vunpack.c.l.b16 %v471
        %v504 = vunpack.c.l.b16 %v472
        %v505 = vunpack.c.l.b16 %v473
        %v506 = vunpack.c.l.b16 %v474
        %v507 = vunpack.c.l.b16 %v475
        %v508 = vunpack.c.l.b16 %v476
        %v509 = vunpack.c.l.b16 %v477
        %v510 = vpack.c.b16 %v495, %v494
        %v511 = vpack.c.b16 %v497, %v496
        %v512 = vpack.c.b16 %v499, %v498
        %v513 = vpack.c.b16 %v501, %v500
        %v514 = vpack.c.b16 %v503, %v502
        %v515 = vpack.c.b16 %v505, %v504
        %v516 = vpack.c.b16 %v507, %v506
        %v517 = vpack.c.b16 %v509, %v508
        %526 = vmatprep.subr.bf16.mxu0 0
        %527 = vmatpush1.bf16.msra.mxu0 %v517
        %528 = vmatprep.subr.bf16.mxu0 0
        %529 = vmatpush1.bf16.msra.mxu0 %v516
        %530 = vmatprep.subr.bf16.mxu0 0
        %531 = vmatpush1.bf16.msra.mxu0 %v515
        %532 = vmatprep.subr.bf16.mxu0 0
        %533 = vmatpush1.bf16.msra.mxu0 %v514
        %534 = vmatprep.subr.bf16.mxu0 0
        %535 = vmatpush1.bf16.msra.mxu0 %v513
        %536 = vmatprep.subr.bf16.mxu0 0
        %537 = vmatpush1.bf16.msra.mxu0 %v512
        %538 = vmatprep.subr.bf16.mxu0 0
        %539 = vmatpush1.bf16.msra.mxu0 %v511
        %540 = vmatprep.subr.bf16.mxu0 0
        %541 = vmatpush1.bf16.msra.mxu0 %v510
        %542 = vmatprep.subr.bf16.mxu0 0
        %543 = vmatpush2.bf16.msra.mxu0 0
        %544 = vmatprep.subr.bf16.mxu0 0
        %545 = vmatpush2.bf16.msra.mxu0 0
        %546 = vmatprep.subr.bf16.mxu0 0
        %547 = vmatpush2.bf16.msra.mxu0 0
        %548 = vmatprep.subr.bf16.mxu0 0
        %549 = vmatpush2.bf16.msra.mxu0 0
        %550 = vmatprep.subr.bf16.mxu0 0
        %551 = vmatpush2.bf16.msra.mxu0 0
        %552 = vmatprep.subr.bf16.mxu0 0
        %553 = vmatpush2.bf16.msra.mxu0 0
        %554 = vmatprep.subr.bf16.mxu0 0
        %555 = vmatpush2.bf16.msra.mxu0 0
        %556 = vmatprep.subr.bf16.mxu0 0
        %557 = vmatpush2.bf16.msra.mxu0 0
        %558 = vmatprep.mubr.bf16.mxu0 0
        %559 = vmatmul.mubr.bf16.gmra.mxu0 %v361
        %v560 = vpop.f32.mrf.mxu0
        %v561 = vadd.f32 0.0, %v560
        %v562 = vpop.f32.mrf.mxu0
        %v563 = vpop.f32.mrf.mxu0
        %v564 = vadd.f32 0.0, %v563
        %v565 = vpop.f32.mrf.mxu0
        %566 = vmatprep.mubr.bf16.mxu0 0
        %567 = vmatmul.mubr.bf16.gmra.mxu0 %v362
        %v568 = vpop.f32.mrf.mxu0
        %v569 = vadd.f32 0.0, %v568
        %v570 = vpop.f32.mrf.mxu0
        %v571 = vpop.f32.mrf.mxu0
        %v572 = vpop.f32.mrf.mxu0
        %573 = vdwg.mxu0
        %s574 = scalar_lea.vmem [#allocation5], 128
        %v575 = vld [vmem:[%s574] sm:$0xf]
        %v576 = vld [vmem:[%s574 + $0x4] sm:$0xf]
        %v577 = vld [vmem:[%s574 + $0x8] sm:$0xf]
        %v578 = vld [vmem:[%s574 + $0xc] sm:$0xf]
        %v579 = vld [vmem:[%s574 + $0x10] sm:$0xf]
        %v580 = vld [vmem:[%s574 + $0x14] sm:$0xf]
        %v581 = vld [vmem:[%s574 + $0x18] sm:$0xf]
        %v582 = vld [vmem:[%s574 + $0x1c] sm:$0xf]
        %v583 = vld [vmem:[%s574 + $0x20] sm:$0xf]
        %v584 = vld [vmem:[%s574 + $0x24] sm:$0xf]
        %v585 = vld [vmem:[%s574 + $0x28] sm:$0xf]
        %v586 = vld [vmem:[%s574 + $0x2c] sm:$0xf]
        %v587 = vld [vmem:[%s574 + $0x30] sm:$0xf]
        %v588 = vld [vmem:[%s574 + $0x34] sm:$0xf]
        %v589 = vld [vmem:[%s574 + $0x38] sm:$0xf]
        %v590 = vld [vmem:[%s574 + $0x3c] sm:$0xf]
        %v607 = vunpack.c.l.b16 %v575
        %v608 = vunpack.c.l.b16 %v576
        %v609 = vunpack.c.l.b16 %v577
        %v610 = vunpack.c.l.b16 %v578
        %v611 = vunpack.c.l.b16 %v579
        %v612 = vunpack.c.l.b16 %v580
        %v613 = vunpack.c.l.b16 %v581
        %v614 = vunpack.c.l.b16 %v582
        %v615 = vunpack.c.l.b16 %v583
        %v616 = vunpack.c.l.b16 %v584
        %v617 = vunpack.c.l.b16 %v585
        %v618 = vunpack.c.l.b16 %v586
        %v619 = vunpack.c.l.b16 %v587
        %v620 = vunpack.c.l.b16 %v588
        %v621 = vunpack.c.l.b16 %v589
        %v622 = vunpack.c.l.b16 %v590
        %v623 = vpack.c.b16 %v608, %v607
        %v624 = vpack.c.b16 %v610, %v609
        %v625 = vpack.c.b16 %v612, %v611
        %v626 = vpack.c.b16 %v614, %v613
        %v627 = vpack.c.b16 %v616, %v615
        %v628 = vpack.c.b16 %v618, %v617
        %v629 = vpack.c.b16 %v620, %v619
        %v630 = vpack.c.b16 %v622, %v621
        %639 = vmatprep.subr.bf16.mxu0 0
        %640 = vmatpush1.bf16.msra.mxu0 %v630
        %641 = vmatprep.subr.bf16.mxu0 0
        %642 = vmatpush1.bf16.msra.mxu0 %v629
        %643 = vmatprep.subr.bf16.mxu0 0
        %644 = vmatpush1.bf16.msra.mxu0 %v628
        %645 = vmatprep.subr.bf16.mxu0 0
        %646 = vmatpush1.bf16.msra.mxu0 %v627
        %647 = vmatprep.subr.bf16.mxu0 0
        %648 = vmatpush1.bf16.msra.mxu0 %v626
        %649 = vmatprep.subr.bf16.mxu0 0
        %650 = vmatpush1.bf16.msra.mxu0 %v625
        %651 = vmatprep.subr.bf16.mxu0 0
        %652 = vmatpush1.bf16.msra.mxu0 %v624
        %653 = vmatprep.subr.bf16.mxu0 0
        %654 = vmatpush1.bf16.msra.mxu0 %v623
        %655 = vmatprep.subr.bf16.mxu0 0
        %656 = vmatpush2.bf16.msra.mxu0 0
        %657 = vmatprep.subr.bf16.mxu0 0
        %658 = vmatpush2.bf16.msra.mxu0 0
        %659 = vmatprep.subr.bf16.mxu0 0
        %660 = vmatpush2.bf16.msra.mxu0 0
        %661 = vmatprep.subr.bf16.mxu0 0
        %662 = vmatpush2.bf16.msra.mxu0 0
        %663 = vmatprep.subr.bf16.mxu0 0
        %664 = vmatpush2.bf16.msra.mxu0 0
        %665 = vmatprep.subr.bf16.mxu0 0
        %666 = vmatpush2.bf16.msra.mxu0 0
        %667 = vmatprep.subr.bf16.mxu0 0
        %668 = vmatpush2.bf16.msra.mxu0 0
        %669 = vmatprep.subr.bf16.mxu0 0
        %670 = vmatpush2.bf16.msra.mxu0 0
        %671 = vmatprep.mubr.bf16.mxu0 0
        %672 = vmatmul.mubr.bf16.gmra.mxu0 %v361
        %v673 = vpop.f32.mrf.mxu0
        %v674 = vadd.f32 0.0, %v673
        %v675 = vpop.f32.mrf.mxu0
        %v676 = vpop.f32.mrf.mxu0
        %v677 = vadd.f32 0.0, %v676
        %v678 = vpop.f32.mrf.mxu0
        %679 = vmatprep.mubr.bf16.mxu0 0
        %680 = vmatmul.mubr.bf16.gmra.mxu0 %v362
        %v681 = vpop.f32.mrf.mxu0
        %v682 = vadd.f32 0.0, %v681
        %v683 = vpop.f32.mrf.mxu0
        %v684 = vpop.f32.mrf.mxu0
        %v685 = vpop.f32.mrf.mxu0
        %686 = vdwg.mxu0
        %v687 = vrot.slane %v448, 7
        %v688 = vrot.slane %v451, 7
        %v689 = vrot.slane %v456, 7
        %vm690 = vcmp.lt.s32.totalorder %v279, 1
        %v691 = vsel %vm690, %v688, %v689
        %v692 = vsel %vm690, %v687, %v688
        %v693 = vsel %vm690, %v689, %v687
        %v694 = vadd.f32 %v693, %v561
        %v695 = vadd.f32 %v692, %v564
        %v696 = vadd.f32 %v691, %v569
        %v697 = vrot.slane %v674, 1
        %v698 = vrot.slane %v677, 1
        %v699 = vrot.slane %v682, 1
        %vm700 = vcmp.lt.s32.totalorder %v279, 7
        %v701 = vsel %vm700, %v698, %v699
        %v702 = vsel %vm700, %v697, %v698
        %v703 = vsel %vm700, %v699, %v697
        %v704 = vadd.f32 %v694, %v702
        %v705 = vadd.f32 %v695, %v701
        %v706 = vadd.f32 %v696, %v703
        %v707 = vld [vmem:[%s3] sm:$0x1]
        %v709 = vlaneseq
        %v710 = vshrl.u32 %v709, 7
        %v711 = vsub.s32 0, %v710
        %v712 = vrot.slane %v707, %v711
        %v714 = vadd.f32 %v704, %v712
        %v715 = vadd.f32 %v705, %v712
        %v716 = vadd.f32 %v706, %v712
        %v717 = vmax.f32 %v714, 0.0
        %v718 = vmax.f32 %v715, 0.0
        %v719 = vmax.f32 %v716, 0.0
        %v720 = vsel %vm336, 1, 0
        %v721 = vsel %vm337, 1, 0
        %v722 = vsel %vm338, 1, 0
        %vm723 = vcmp.eq.s32.totalorder %v720, 1
        %vm724 = vcmp.eq.s32.totalorder %v721, 1
        %vm725 = vcmp.eq.s32.totalorder %v722, 1
        %v726 = vsel %vm723, %v717, 0.0
        %v727 = vsel %vm724, %v718, 0.0
        %v728 = vsel %vm725, %v719, 0.0
        %v729 = vpack.c.bf16 %v727, %v726
        %v730 = vpack.c.bf16 %v728, %v728
        %v731 = vld [vmem:[#allocation7] sm:$0xf]
        %v732 = vld [vmem:[#allocation7 + $0x4] sm:$0xf]
        %v733 = vld [vmem:[#allocation7 + $0x8] sm:$0xf]
        %v734 = vld [vmem:[#allocation7 + $0xc] sm:$0xf]
        %v735 = vld [vmem:[#allocation7 + $0x10] sm:$0xf]
        %v736 = vld [vmem:[#allocation7 + $0x14] sm:$0xf]
        %v737 = vld [vmem:[#allocation7 + $0x18] sm:$0xf]
        %v738 = vld [vmem:[#allocation7 + $0x1c] sm:$0xf]
        %v739 = vld [vmem:[#allocation7 + $0x20] sm:$0xf]
        %v740 = vld [vmem:[#allocation7 + $0x24] sm:$0xf]
        %v741 = vld [vmem:[#allocation7 + $0x28] sm:$0xf]
        %v742 = vld [vmem:[#allocation7 + $0x2c] sm:$0xf]
        %v743 = vld [vmem:[#allocation7 + $0x30] sm:$0xf]
        %v744 = vld [vmem:[#allocation7 + $0x34] sm:$0xf]
        %v745 = vld [vmem:[#allocation7 + $0x38] sm:$0xf]
        %v746 = vld [vmem:[#allocation7 + $0x3c] sm:$0xf]
        %v763 = vunpack.c.l.b16 %v731
        %v764 = vunpack.c.l.b16 %v732
        %v765 = vunpack.c.l.b16 %v733
        %v766 = vunpack.c.l.b16 %v734
        %v767 = vunpack.c.l.b16 %v735
        %v768 = vunpack.c.l.b16 %v736
        %v769 = vunpack.c.l.b16 %v737
        %v770 = vunpack.c.l.b16 %v738
        %v771 = vunpack.c.l.b16 %v739
        %v772 = vunpack.c.l.b16 %v740
        %v773 = vunpack.c.l.b16 %v741
        %v774 = vunpack.c.l.b16 %v742
        %v775 = vunpack.c.l.b16 %v743
        %v776 = vunpack.c.l.b16 %v744
        %v777 = vunpack.c.l.b16 %v745
        %v778 = vunpack.c.l.b16 %v746
        %v779 = vpack.c.b16 %v764, %v763
        %v780 = vpack.c.b16 %v766, %v765
        %v781 = vpack.c.b16 %v768, %v767
        %v782 = vpack.c.b16 %v770, %v769
        %v783 = vpack.c.b16 %v772, %v771
        %v784 = vpack.c.b16 %v774, %v773
        %v785 = vpack.c.b16 %v776, %v775
        %v786 = vpack.c.b16 %v778, %v777
        %795 = vmatprep.subr.bf16.mxu0 0
        %796 = vmatpush1.bf16.msra.mxu0 %v786
        %797 = vmatprep.subr.bf16.mxu0 0
        %798 = vmatpush1.bf16.msra.mxu0 %v785
        %799 = vmatprep.subr.bf16.mxu0 0
        %800 = vmatpush1.bf16.msra.mxu0 %v784
        %801 = vmatprep.subr.bf16.mxu0 0
        %802 = vmatpush1.bf16.msra.mxu0 %v783
        %803 = vmatprep.subr.bf16.mxu0 0
        %804 = vmatpush1.bf16.msra.mxu0 %v782
        %805 = vmatprep.subr.bf16.mxu0 0
        %806 = vmatpush1.bf16.msra.mxu0 %v781
        %807 = vmatprep.subr.bf16.mxu0 0
        %808 = vmatpush1.bf16.msra.mxu0 %v780
        %809 = vmatprep.subr.bf16.mxu0 0
        %810 = vmatpush1.bf16.msra.mxu0 %v779
        %811 = vmatprep.subr.bf16.mxu0 0
        %812 = vmatpush2.bf16.msra.mxu0 0
        %813 = vmatprep.subr.bf16.mxu0 0
        %814 = vmatpush2.bf16.msra.mxu0 0
        %815 = vmatprep.subr.bf16.mxu0 0
        %816 = vmatpush2.bf16.msra.mxu0 0
        %817 = vmatprep.subr.bf16.mxu0 0
        %818 = vmatpush2.bf16.msra.mxu0 0
        %819 = vmatprep.subr.bf16.mxu0 0
        %820 = vmatpush2.bf16.msra.mxu0 0
        %821 = vmatprep.subr.bf16.mxu0 0
        %822 = vmatpush2.bf16.msra.mxu0 0
        %823 = vmatprep.subr.bf16.mxu0 0
        %824 = vmatpush2.bf16.msra.mxu0 0
        %825 = vmatprep.subr.bf16.mxu0 0
        %826 = vmatpush2.bf16.msra.mxu0 0
        %827 = vmatprep.mubr.bf16.mxu0 0
        %828 = vmatmul.mubr.bf16.gmra.mxu0 %v729
        %v829 = vpop.f32.mrf.mxu0
        %v830 = vadd.f32 0.0, %v829
        %v831 = vpop.f32.mrf.mxu0
        %v832 = vpop.f32.mrf.mxu0
        %v833 = vadd.f32 0.0, %v832
        %v834 = vpop.f32.mrf.mxu0
        %835 = vmatprep.mubr.bf16.mxu0 0
        %836 = vmatmul.mubr.bf16.gmra.mxu0 %v730
        %v837 = vpop.f32.mrf.mxu0
        %v838 = vadd.f32 0.0, %v837
        %v839 = vpop.f32.mrf.mxu0
        %v840 = vpop.f32.mrf.mxu0
        %v841 = vpop.f32.mrf.mxu0
        %842 = vdwg.mxu0
        %s843 = scalar_lea.vmem [#allocation7], 64
        %v844 = vld [vmem:[%s843] sm:$0xf]
        %v845 = vld [vmem:[%s843 + $0x4] sm:$0xf]
        %v846 = vld [vmem:[%s843 + $0x8] sm:$0xf]
        %v847 = vld [vmem:[%s843 + $0xc] sm:$0xf]
        %v848 = vld [vmem:[%s843 + $0x10] sm:$0xf]
        %v849 = vld [vmem:[%s843 + $0x14] sm:$0xf]
        %v850 = vld [vmem:[%s843 + $0x18] sm:$0xf]
        %v851 = vld [vmem:[%s843 + $0x1c] sm:$0xf]
        %v852 = vld [vmem:[%s843 + $0x20] sm:$0xf]
        %v853 = vld [vmem:[%s843 + $0x24] sm:$0xf]
        %v854 = vld [vmem:[%s843 + $0x28] sm:$0xf]
        %v855 = vld [vmem:[%s843 + $0x2c] sm:$0xf]
        %v856 = vld [vmem:[%s843 + $0x30] sm:$0xf]
        %v857 = vld [vmem:[%s843 + $0x34] sm:$0xf]
        %v858 = vld [vmem:[%s843 + $0x38] sm:$0xf]
        %v859 = vld [vmem:[%s843 + $0x3c] sm:$0xf]
        %v876 = vunpack.c.l.b16 %v844
        %v877 = vunpack.c.l.b16 %v845
        %v878 = vunpack.c.l.b16 %v846
        %v879 = vunpack.c.l.b16 %v847
        %v880 = vunpack.c.l.b16 %v848
        %v881 = vunpack.c.l.b16 %v849
        %v882 = vunpack.c.l.b16 %v850
        %v883 = vunpack.c.l.b16 %v851
        %v884 = vunpack.c.l.b16 %v852
        %v885 = vunpack.c.l.b16 %v853
        %v886 = vunpack.c.l.b16 %v854
        %v887 = vunpack.c.l.b16 %v855
        %v888 = vunpack.c.l.b16 %v856
        %v889 = vunpack.c.l.b16 %v857
        %v890 = vunpack.c.l.b16 %v858
        %v891 = vunpack.c.l.b16 %v859
        %v892 = vpack.c.b16 %v877, %v876
        %v893 = vpack.c.b16 %v879, %v878
        %v894 = vpack.c.b16 %v881, %v880
        %v895 = vpack.c.b16 %v883, %v882
        %v896 = vpack.c.b16 %v885, %v884
        %v897 = vpack.c.b16 %v887, %v886
        %v898 = vpack.c.b16 %v889, %v888
        %v899 = vpack.c.b16 %v891, %v890
        %908 = vmatprep.subr.bf16.mxu0 0
        %909 = vmatpush1.bf16.msra.mxu0 %v899
        %910 = vmatprep.subr.bf16.mxu0 0
        %911 = vmatpush1.bf16.msra.mxu0 %v898
        %912 = vmatprep.subr.bf16.mxu0 0
        %913 = vmatpush1.bf16.msra.mxu0 %v897
        %914 = vmatprep.subr.bf16.mxu0 0
        %915 = vmatpush1.bf16.msra.mxu0 %v896
        %916 = vmatprep.subr.bf16.mxu0 0
        %917 = vmatpush1.bf16.msra.mxu0 %v895
        %918 = vmatprep.subr.bf16.mxu0 0
        %919 = vmatpush1.bf16.msra.mxu0 %v894
        %920 = vmatprep.subr.bf16.mxu0 0
        %921 = vmatpush1.bf16.msra.mxu0 %v893
        %922 = vmatprep.subr.bf16.mxu0 0
        %923 = vmatpush1.bf16.msra.mxu0 %v892
        %924 = vmatprep.subr.bf16.mxu0 0
        %925 = vmatpush2.bf16.msra.mxu0 0
        %926 = vmatprep.subr.bf16.mxu0 0
        %927 = vmatpush2.bf16.msra.mxu0 0
        %928 = vmatprep.subr.bf16.mxu0 0
        %929 = vmatpush2.bf16.msra.mxu0 0
        %930 = vmatprep.subr.bf16.mxu0 0
        %931 = vmatpush2.bf16.msra.mxu0 0
        %932 = vmatprep.subr.bf16.mxu0 0
        %933 = vmatpush2.bf16.msra.mxu0 0
        %934 = vmatprep.subr.bf16.mxu0 0
        %935 = vmatpush2.bf16.msra.mxu0 0
        %936 = vmatprep.subr.bf16.mxu0 0
        %937 = vmatpush2.bf16.msra.mxu0 0
        %938 = vmatprep.subr.bf16.mxu0 0
        %939 = vmatpush2.bf16.msra.mxu0 0
        %940 = vmatprep.mubr.bf16.mxu0 0
        %941 = vmatmul.mubr.bf16.gmra.mxu0 %v729
        %v942 = vpop.f32.mrf.mxu0
        %v943 = vadd.f32 0.0, %v942
        %v944 = vpop.f32.mrf.mxu0
        %v945 = vpop.f32.mrf.mxu0
        %v946 = vadd.f32 0.0, %v945
        %v947 = vpop.f32.mrf.mxu0
        %948 = vmatprep.mubr.bf16.mxu0 0
        %949 = vmatmul.mubr.bf16.gmra.mxu0 %v730
        %v950 = vpop.f32.mrf.mxu0
        %v951 = vadd.f32 0.0, %v950
        %v952 = vpop.f32.mrf.mxu0
        %v953 = vpop.f32.mrf.mxu0
        %v954 = vpop.f32.mrf.mxu0
        %955 = vdwg.mxu0
        %s956 = scalar_lea.vmem [#allocation7], 128
        %v957 = vld [vmem:[%s956] sm:$0xf]
        %v958 = vld [vmem:[%s956 + $0x4] sm:$0xf]
        %v959 = vld [vmem:[%s956 + $0x8] sm:$0xf]
        %v960 = vld [vmem:[%s956 + $0xc] sm:$0xf]
        %v961 = vld [vmem:[%s956 + $0x10] sm:$0xf]
        %v962 = vld [vmem:[%s956 + $0x14] sm:$0xf]
        %v963 = vld [vmem:[%s956 + $0x18] sm:$0xf]
        %v964 = vld [vmem:[%s956 + $0x1c] sm:$0xf]
        %v965 = vld [vmem:[%s956 + $0x20] sm:$0xf]
        %v966 = vld [vmem:[%s956 + $0x24] sm:$0xf]
        %v967 = vld [vmem:[%s956 + $0x28] sm:$0xf]
        %v968 = vld [vmem:[%s956 + $0x2c] sm:$0xf]
        %v969 = vld [vmem:[%s956 + $0x30] sm:$0xf]
        %v970 = vld [vmem:[%s956 + $0x34] sm:$0xf]
        %v971 = vld [vmem:[%s956 + $0x38] sm:$0xf]
        %v972 = vld [vmem:[%s956 + $0x3c] sm:$0xf]
        %v989 = vunpack.c.l.b16 %v957
        %v990 = vunpack.c.l.b16 %v958
        %v991 = vunpack.c.l.b16 %v959
        %v992 = vunpack.c.l.b16 %v960
        %v993 = vunpack.c.l.b16 %v961
        %v994 = vunpack.c.l.b16 %v962
        %v995 = vunpack.c.l.b16 %v963
        %v996 = vunpack.c.l.b16 %v964
        %v997 = vunpack.c.l.b16 %v965
        %v998 = vunpack.c.l.b16 %v966
        %v999 = vunpack.c.l.b16 %v967
        %v1000 = vunpack.c.l.b16 %v968
        %v1001 = vunpack.c.l.b16 %v969
        %v1002 = vunpack.c.l.b16 %v970
        %v1003 = vunpack.c.l.b16 %v971
        %v1004 = vunpack.c.l.b16 %v972
        %v1005 = vpack.c.b16 %v990, %v989
        %v1006 = vpack.c.b16 %v992, %v991
        %v1007 = vpack.c.b16 %v994, %v993
        %v1008 = vpack.c.b16 %v996, %v995
        %v1009 = vpack.c.b16 %v998, %v997
        %v1010 = vpack.c.b16 %v1000, %v999
        %v1011 = vpack.c.b16 %v1002, %v1001
        %v1012 = vpack.c.b16 %v1004, %v1003
        %1021 = vmatprep.subr.bf16.mxu0 0
        %1022 = vmatpush1.bf16.msra.mxu0 %v1012
        %1023 = vmatprep.subr.bf16.mxu0 0
        %1024 = vmatpush1.bf16.msra.mxu0 %v1011
        %1025 = vmatprep.subr.bf16.mxu0 0
        %1026 = vmatpush1.bf16.msra.mxu0 %v1010
        %1027 = vmatprep.subr.bf16.mxu0 0
        %1028 = vmatpush1.bf16.msra.mxu0 %v1009
        %1029 = vmatprep.subr.bf16.mxu0 0
        %1030 = vmatpush1.bf16.msra.mxu0 %v1008
        %1031 = vmatprep.subr.bf16.mxu0 0
        %1032 = vmatpush1.bf16.msra.mxu0 %v1007
        %1033 = vmatprep.subr.bf16.mxu0 0
        %1034 = vmatpush1.bf16.msra.mxu0 %v1006
        %1035 = vmatprep.subr.bf16.mxu0 0
        %1036 = vmatpush1.bf16.msra.mxu0 %v1005
        %1037 = vmatprep.subr.bf16.mxu0 0
        %1038 = vmatpush2.bf16.msra.mxu0 0
        %1039 = vmatprep.subr.bf16.mxu0 0
        %1040 = vmatpush2.bf16.msra.mxu0 0
        %1041 = vmatprep.subr.bf16.mxu0 0
        %1042 = vmatpush2.bf16.msra.mxu0 0
        %1043 = vmatprep.subr.bf16.mxu0 0
        %1044 = vmatpush2.bf16.msra.mxu0 0
        %1045 = vmatprep.subr.bf16.mxu0 0
        %1046 = vmatpush2.bf16.msra.mxu0 0
        %1047 = vmatprep.subr.bf16.mxu0 0
        %1048 = vmatpush2.bf16.msra.mxu0 0
        %1049 = vmatprep.subr.bf16.mxu0 0
        %1050 = vmatpush2.bf16.msra.mxu0 0
        %1051 = vmatprep.subr.bf16.mxu0 0
        %1052 = vmatpush2.bf16.msra.mxu0 0
        %1053 = vmatprep.mubr.bf16.mxu0 0
        %1054 = vmatmul.mubr.bf16.gmra.mxu0 %v729
        %v1055 = vpop.f32.mrf.mxu0
        %v1056 = vadd.f32 0.0, %v1055
        %v1057 = vpop.f32.mrf.mxu0
        %v1058 = vpop.f32.mrf.mxu0
        %v1059 = vadd.f32 0.0, %v1058
        %v1060 = vpop.f32.mrf.mxu0
        %1061 = vmatprep.mubr.bf16.mxu0 0
        %1062 = vmatmul.mubr.bf16.gmra.mxu0 %v730
        %v1063 = vpop.f32.mrf.mxu0
        %v1064 = vadd.f32 0.0, %v1063
        %v1065 = vpop.f32.mrf.mxu0
        %v1066 = vpop.f32.mrf.mxu0
        %v1067 = vpop.f32.mrf.mxu0
        %1068 = vdwg.mxu0
        %v1069 = vrot.slane %v830, 7
        %v1070 = vrot.slane %v833, 7
        %v1071 = vrot.slane %v838, 7
        %v1072 = vsel %vm690, %v1070, %v1071
        %v1073 = vsel %vm690, %v1069, %v1070
        %v1074 = vsel %vm690, %v1071, %v1069
        %v1075 = vadd.f32 %v1074, %v943
        %v1076 = vadd.f32 %v1073, %v946
        %v1077 = vadd.f32 %v1072, %v951
        %v1078 = vrot.slane %v1056, 1
        %v1079 = vrot.slane %v1059, 1
        %v1080 = vrot.slane %v1064, 1
        %v1081 = vsel %vm700, %v1079, %v1080
        %v1082 = vsel %vm700, %v1078, %v1079
        %v1083 = vsel %vm700, %v1080, %v1078
        %v1084 = vadd.f32 %v1075, %v1082
        %v1085 = vadd.f32 %v1076, %v1081
        %v1086 = vadd.f32 %v1077, %v1083
        %v1087 = vld [vmem:[%s4] sm:$0x1]
        %v1089 = vlaneseq
        %v1090 = vshrl.u32 %v1089, 7
        %v1091 = vsub.s32 0, %v1090
        %v1092 = vrot.slane %v1087, %v1091
        %v1094 = vadd.f32 %v1084, %v1092
        %v1095 = vadd.f32 %v1085, %v1092
        %v1096 = vadd.f32 %v1086, %v1092
        %v1097 = vmax.f32 %v1094, 0.0
        %v1098 = vmax.f32 %v1095, 0.0
        %v1099 = vmax.f32 %v1096, 0.0
        %v1100 = vunpack.c.l.bf16 %v275
        %v1101 = vunpack.c.l.bf16 %v276
        %v1102 = vunpack.c.l.bf16 %v277
        %v1103 = vadd.f32 %v1097, %v1100
        %v1104 = vadd.f32 %v1098, %v1101
        %v1105 = vadd.f32 %v1099, %v1102
        %v1106 = vmax.f32 %v1103, 0.0
        %v1107 = vmax.f32 %v1104, 0.0
        %v1108 = vmax.f32 %v1105, 0.0
        %v1109 = vpack.c.bf16 %v1107, %v1106
        %v1110 = vpack.c.bf16 %v1108, %v1108
        %v1113 = vunpack.c.l.b16 %v1109
        %v1114 = vunpack.c.h.b16 %v1109
        %v1115 = vunpack.c.l.b16 %v1110
        %v1116 = vpack.c.b16 %v1113, %v1113
        %v1117 = vpack.c.b16 %v1114, %v1114
        %v1118 = vpack.c.b16 %v1115, %v1115
        %1122 = vst [vmem:[%s271] sm:$0xf] %v1116
        %1123 = vst [vmem:[%s271 + $0x4] sm:$0xf] %v1117
        %1124 = vst [vmem:[%s271 + $0x8] sm:$0xf] %v1118
        %s1125 = sand.u32 %s141, 1
        %s1126 = scalar_lea.sflag [#allocation4], %s1125
        %s1127 = sand.u32 %s141, 1
        %s1128 = smul.addr %s1127, 12
        %s1129 = scalar_lea.vmem [#allocation8], %s1128
        // Predicated region
        $region53: #{tpu_custom_call.1} parent=39 // pred_check
          %p1130 = pneg %p151
        $region54: #{tpu_custom_call.1} parent=39 // pred_check_branch
          %1132 = sbr.rel (%p1130) target = $region56
        $region55: #{tpu_custom_call.1} parent=39 // pred_region
          %s1133 = smul.u32 3, %s23
          %s1135 = ssub.s32 192, 192
          %1136 = vsyncadd %s1126, %s1135
          %s1137 = smul.addr %s1133, 64
          %s1138 = scalar_lea.hbm %s5, %s1137
          %s1139 = sshll.u32 %s1129, 4
          %s1140 = int_to_ptr.vmem [resolvable:$true] %s1139
          %1145 = dma.vmem_to_hbm [thread:$0]  %s1140, 192, %s1138, %s1126, 64, 64, 4
        $region56: #{tpu_custom_call.1} parent=39 // pred_fallthru
          _
      $region40: #{tpu_custom_call.1} parent=5 // pred_fallthru
        _
      %p1146 = scmp.le.s32.totalorder 2, %s18
      // Predicated region
      $region57: #{tpu_custom_call.1} parent=5 // pred_check
        %p1147 = pneg %p1146
      $region58: #{tpu_custom_call.1} parent=5 // pred_check_branch
        %1149 = sbr.rel (%p1147) target = $region60
      $region59: #{tpu_custom_call.1} parent=5 // pred_region
        %s1150 = ssub.s32 %s18, 2
        // Predicated region
        $region61: #{tpu_custom_call.1} parent=59 // pred_check
          %p1151 = pneg %p157
        $region62: #{tpu_custom_call.1} parent=59 // pred_check_branch
          %1153 = sbr.rel (%p1151) target = $region64
        $region63: #{tpu_custom_call.1} parent=59 // pred_region
          %s1154 = sand.u32 %s142, 1
          %s1155 = scalar_lea.sflag [#allocation4], %s1154
          %s1156 = sand.u32 %s142, 1
          %s1157 = smul.addr %s1156, 12
          %s1158 = scalar_lea.vmem [#allocation8], %s1157
          %1159 = dma.done %s1155, 192
        $region64: #{tpu_custom_call.1} parent=59 // pred_fallthru
          _
      $region60: #{tpu_custom_call.1} parent=5 // pred_fallthru
        _
    $region6: #{tpu_custom_call.1} parent=1 // loop_footer
      %s22 = sadd.s32 1, %s18
    $region7: #{tpu_custom_call.1} parent=1 // loop_footer_branch
      %17 = sbr.rel target = $region3
    $region8: #{tpu_custom_call.1} parent=1 // loop_exit
      _
    %1160 = vsyncpa [#allocation3], 1
    %s1161 = scalar_lea.sflag [#allocation3], 1
    %1162 = vsyncpa %s1161, 1
    %1163 = vsyncpa [#allocation6], 1
    %1164 = vsyncpa [#allocation4], 1
    %s1165 = scalar_lea.sflag [#allocation4], 1
    %1166 = vsyncpa %s1165, 1

// kernel: tpu_custom_call.1
$region0: #{tpu_custom_call.1}
  #allocation0 [shape = 'u32[]', space=smem, size = 0x4, offset = 0x4, fixed_abs, tag = 'smem constant byte address 0x4 - core index']
  #allocation1 [shape = 'u32[144,128]{1,0:T(1,128)}', space=vmem, size = 0x12000, scoped, tag = 'internal scratch']
  %s0 = inlined_call_operand.hbm [shape: bf16[48,128], index: 0, kind: input, shape index: {}]
  %s1 = inlined_call_operand.hbm [shape: bf16[3,128,128], index: 1, kind: input, shape index: {}]
  %s2 = inlined_call_operand.hbm [shape: bf16[3,128,128], index: 2, kind: input, shape index: {}]
  %s3 = inlined_call_operand.vmem [shape: f32[1,128], index: 3, kind: input, shape index: {}]
  %s4 = inlined_call_operand.vmem [shape: f32[1,128], index: 4, kind: input, shape index: {}]
  %s5 = inlined_call_operand.hbm [shape: bf16[48,128], index: 5, kind: output, shape index: {}]
  %s6 = sld [smem:[#allocation0]]
  $region65: #{tpu_custom_call.1} parent=0
    _
  %s8 = ssub.s32 1, %s6
  %s9 = scalar_select 0, %s8, %s6
  $region1: #{tpu_custom_call.1} parent=0
    #allocation2 [shape = 'u8[12288]{0}', space=vmem, size = 0x3000, scoped, tag = 'input window, operand 0']
    #allocation3 [shape = 's32[2]{0}', space=sflag, size = 0x8, scoped, tag = 'scoped memory for tpu_custom_call.1']
    #allocation4 [shape = 's32[2]{0}', space=sflag, size = 0x8, scoped, tag = 'scoped memory for tpu_custom_call.1']
    #allocation5 [shape = 'u8[98304]{0}', space=vmem, size = 0x18000, scoped, tag = 'input window, operand 1, single buffered']
    #allocation6 [shape = 's32[1]{0}', space=sflag, size = 0x4, scoped, tag = 'scoped memory for tpu_custom_call.1']
    #allocation7 [shape = 'u8[98304]{0}', space=vmem, size = 0x18000, scoped, tag = 'input window, operand 2, single buffered']
    #allocation8 [shape = 'u8[12288]{0}', space=vmem, size = 0x3000, scoped, tag = 'output window, operand 0']
    %10 = vsyncpa [#allocation3], 0
    %s11 = scalar_lea.sflag [#allocation3], 1
    %12 = vsyncpa %s11, 0
    %13 = vsyncpa [#allocation6], 0
    %14 = vsyncpa [#allocation4], 0
    %s15 = scalar_lea.sflag [#allocation4], 1
    %16 = vsyncpa %s15, 0
    loop: start=0, step=1, limit=4
    $region2: #{tpu_custom_call.1} parent=1 // loop_pre_header
      _
    $region3: #{tpu_custom_call.1} parent=1 // loop_header
      %s18 = sphi 0, %s22
      %p19 = scmp.ge.s32.totalorder %s18, 4
      %s28 = sphi 0, %s30
      %s31 = sphi 0, %s28
      %s32 = sphi 0, %s31
      %s48 = sphi 0, %s32
      %s52 = sphi 0, %s52
      %s54 = sphi 0, %s52
      %s55 = sphi 0, %s54
      %s69 = sphi 0, %s55
      %s73 = sphi 0, %s73
      %s75 = sphi 0, %s73
      %s76 = sphi 0, %s75
      %s90 = sphi 0, %s76
      %s94 = sphi 0, %s94
      %s96 = sphi 0, %s94
      %s97 = sphi 0, %s96
      %s111 = sphi 0, %s97
      %s115 = sphi 0, %s115
      %s117 = sphi 0, %s115
      %s118 = sphi 0, %s117
      %s132 = sphi 0, %s118
      %s138 = sphi 0, %s140
      %s141 = sphi 0, %s138
      %s142 = sphi 0, %s141
      %s158 = sphi 0, %s142
    $region4: #{tpu_custom_call.1} parent=1 // loop_header_branch
      %21 = sbr.rel (%p19) target = $region8
    $region5: #{tpu_custom_call.1} parent=1 // loop_body
      %s23 = ssub.s32 %s18, 1
      %s24 = ssub.s32 %s18, 2
      %s25 = sadd.s32 %s18, 1
      %s26 = ssub.s32 %s18, %s25
      %p27 = scmp.eq.s32.totalorder %s26, 0
      %s29 = sadd.s32 %s28, 1
      %s30 = scalar_select %p27, %s28, %s29
      %p33 = pneg %p27
      %p34 = scmp.eq.s32.totalorder %s18, 1
      %p35 = por %p33, %p34
      %p36 = scmp.ne.s32.totalorder %s28, %s31
      %p37 = scmp.eq.s32.totalorder %s18, 0
      %p38 = por %p36, %p37
      %p39 = scmp.ne.s32.totalorder %s28, %s31
      %p40 = scmp.eq.s32.totalorder %s23, 1
      %p41 = por %p39, %p40
      %p42 = scmp.ne.s32.totalorder %s31, %s32
      %p43 = scmp.eq.s32.totalorder %s23, 0
      %p44 = por %p42, %p43
      %p45 = scmp.ne.s32.totalorder %s31, %s32
      %p46 = scmp.eq.s32.totalorder %s24, 1
      %p47 = por %p45, %p46
      %p49 = scmp.ne.s32.totalorder %s32, %s48
      %p50 = scmp.eq.s32.totalorder %s24, 0
      %p51 = por %p49, %p50
      %s53 = sadd.s32 %s52, 1
      %p56 = scmp.eq.s32.totalorder %s18, 1
      %p57 = scmp.ne.s32.totalorder %s52, %s54
      %p58 = scmp.eq.s32.totalorder %s18, 0
      %p59 = por %p57, %p58
      %p60 = scmp.ne.s32.totalorder %s52, %s54
      %p61 = scmp.eq.s32.totalorder %s23, 1
      %p62 = por %p60, %p61
      %p63 = scmp.ne.s32.totalorder %s54, %s55
      %p64 = scmp.eq.s32.totalorder %s23, 0
      %p65 = por %p63, %p64
      %p66 = scmp.ne.s32.totalorder %s54, %s55
      %p67 = scmp.eq.s32.totalorder %s24, 1
      %p68 = por %p66, %p67
      %p70 = scmp.ne.s32.totalorder %s55, %s69
      %p71 = scmp.eq.s32.totalorder %s24, 0
      %p72 = por %p70, %p71
      %s74 = sadd.s32 %s73, 1
      %p77 = scmp.eq.s32.totalorder %s18, 1
      %p78 = scmp.ne.s32.totalorder %s73, %s75
      %p79 = scmp.eq.s32.totalorder %s18, 0
      %p80 = por %p78, %p79
      %p81 = scmp.ne.s32.totalorder %s73, %s75
      %p82 = scmp.eq.s32.totalorder %s23, 1
      %p83 = por %p81, %p82
      %p84 = scmp.ne.s32.totalorder %s75, %s76
      %p85 = scmp.eq.s32.totalorder %s23, 0
      %p86 = por %p84, %p85
      %p87 = scmp.ne.s32.totalorder %s75, %s76
      %p88 = scmp.eq.s32.totalorder %s24, 1
      %p89 = por %p87, %p88
      %p91 = scmp.ne.s32.totalorder %s76, %s90
      %p92 = scmp.eq.s32.totalorder %s24, 0
      %p93 = por %p91, %p92
      %s95 = sadd.s32 %s94, 1
      %p98 = scmp.eq.s32.totalorder %s18, 1
      %p99 = scmp.ne.s32.totalorder %s94, %s96
      %p100 = scmp.eq.s32.totalorder %s18, 0
      %p101 = por %p99, %p100
      %p102 = scmp.ne.s32.totalorder %s94, %s96
      %p103 = scmp.eq.s32.totalorder %s23, 1
      %p104 = por %p102, %p103
      %p105 = scmp.ne.s32.totalorder %s96, %s97
      %p106 = scmp.eq.s32.totalorder %s23, 0
      %p107 = por %p105, %p106
      %p108 = scmp.ne.s32.totalorder %s96, %s97
      %p109 = scmp.eq.s32.totalorder %s24, 1
      %p110 = por %p108, %p109
      %p112 = scmp.ne.s32.totalorder %s97, %s111
      %p113 = scmp.eq.s32.totalorder %s24, 0
      %p114 = por %p112, %p113
      %s116 = sadd.s32 %s115, 1
      %p119 = scmp.eq.s32.totalorder %s18, 1
      %p120 = scmp.ne.s32.totalorder %s115, %s117
      %p121 = scmp.eq.s32.totalorder %s18, 0
      %p122 = por %p120, %p121
      %p123 = scmp.ne.s32.totalorder %s115, %s117
      %p124 = scmp.eq.s32.totalorder %s23, 1
      %p125 = por %p123, %p124
      %p126 = scmp.ne.s32.totalorder %s117, %s118
      %p127 = scmp.eq.s32.totalorder %s23, 0
      %p128 = por %p126, %p127
      %p129 = scmp.ne.s32.totalorder %s117, %s118
      %p130 = scmp.eq.s32.totalorder %s24, 1
      %p131 = por %p129, %p130
      %p133 = scmp.ne.s32.totalorder %s118, %s132
      %p134 = scmp.eq.s32.totalorder %s24, 0
      %p135 = por %p133, %p134
      %s136 = ssub.s32 %s18, %s25
      %p137 = scmp.eq.s32.totalorder %s136, 0
      %s139 = sadd.s32 %s138, 1
      %s140 = scalar_select %p137, %s138, %s139
      %p143 = pneg %p137
      %p144 = scmp.eq.s32.totalorder %s18, 1
      %p145 = por %p143, %p144
      %p146 = scmp.ne.s32.totalorder %s138, %s141
      %p147 = scmp.eq.s32.totalorder %s18, 0
      %p148 = por %p146, %p147
      %p149 = scmp.ne.s32.totalorder %s138, %s141
      %p150 = scmp.eq.s32.totalorder %s23, 1
      %p151 = por %p149, %p150
      %p152 = scmp.ne.s32.totalorder %s141, %s142
      %p153 = scmp.eq.s32.totalorder %s23, 0
      %p154 = por %p152, %p153
      %p155 = scmp.ne.s32.totalorder %s141, %s142
      %p156 = scmp.eq.s32.totalorder %s24, 1
      %p157 = por %p155, %p156
      %p159 = scmp.ne.s32.totalorder %s142, %s158
      %p160 = scmp.eq.s32.totalorder %s24, 0
      %p161 = por %p159, %p160
      %p162 = scmp.le.s32.totalorder 1, %s18
      %p163 = scmp.lt.s32.totalorder %s18, 3
      %p164 = pnand %p162, %p163
      %p165 = pneg %p164
      // Predicated region
      $region9: #{tpu_custom_call.1} parent=5 // pred_check
        _
      $region10: #{tpu_custom_call.1} parent=5 // pred_check_branch
        %167 = sbr.rel (%p164) target = $region12
      $region11: #{tpu_custom_call.1} parent=5 // pred_region
        %s168 = ssub.s32 %s18, 1
        // Predicated region
        $region13: #{tpu_custom_call.1} parent=11 // pred_check
          %p169 = pneg %p65
        $region14: #{tpu_custom_call.1} parent=11 // pred_check_branch
          %171 = sbr.rel (%p169) target = $region16
        $region15: #{tpu_custom_call.1} parent=11 // pred_region
          %s173 = ssub.s32 3072, 3072
          %174 = vsyncadd [#allocation6], %s173
          %s175 = sshll.u32 [#allocation5], 4
          %s176 = int_to_ptr.vmem [resolvable:$true] %s175
          %181 = dma.hbm_to_vmem [thread:$0]  %s1, 3072, %s176, [#allocation6], 64, 64, 4
        $region16: #{tpu_custom_call.1} parent=11 // pred_fallthru
          _
        // Predicated region
        $region17: #{tpu_custom_call.1} parent=11 // pred_check
          %p182 = pneg %p86
        $region18: #{tpu_custom_call.1} parent=11 // pred_check_branch
          %184 = sbr.rel (%p182) target = $region20
        $region19: #{tpu_custom_call.1} parent=11 // pred_region
          %s186 = ssub.s32 3072, 3072
          %187 = vsyncadd [#allocation6], %s186
          %s188 = sshll.u32 [#allocation7], 4
          %s189 = int_to_ptr.vmem [resolvable:$true] %s188
          %194 = dma.hbm_to_vmem [thread:$0]  %s2, 3072, %s189, [#allocation6], 64, 64, 4
        $region20: #{tpu_custom_call.1} parent=11 // pred_fallthru
          _
        // Predicated region
        $region21: #{tpu_custom_call.1} parent=11 // pred_check
          %p195 = pneg %p107
        $region22: #{tpu_custom_call.1} parent=11 // pred_check_branch
          %197 = sbr.rel (%p195) target = $region24
        $region23: #{tpu_custom_call.1} parent=11 // pred_region
          _
        $region24: #{tpu_custom_call.1} parent=11 // pred_fallthru
          _
        // Predicated region
        $region25: #{tpu_custom_call.1} parent=11 // pred_check
          %p198 = pneg %p128
        $region26: #{tpu_custom_call.1} parent=11 // pred_check_branch
          %200 = sbr.rel (%p198) target = $region28
        $region27: #{tpu_custom_call.1} parent=11 // pred_region
          _
        $region28: #{tpu_custom_call.1} parent=11 // pred_fallthru
          _
      $region12: #{tpu_custom_call.1} parent=5 // pred_fallthru
        _
      %p201 = scmp.lt.s32.totalorder %s18, 2
      // Predicated region
      $region29: #{tpu_custom_call.1} parent=5 // pred_check
        %p202 = pneg %p201
      $region30: #{tpu_custom_call.1} parent=5 // pred_check_branch
        %204 = sbr.rel (%p202) target = $region32
      $region31: #{tpu_custom_call.1} parent=5 // pred_region
        // Predicated region
        $region33: #{tpu_custom_call.1} parent=31 // pred_check
          %p205 = pneg %p38
        $region34: #{tpu_custom_call.1} parent=31 // pred_check_branch
          %207 = sbr.rel (%p205) target = $region36
        $region35: #{tpu_custom_call.1} parent=31 // pred_region
          %s208 = sand.u32 %s28, 1
          %s209 = scalar_lea.sflag [#allocation3], %s208
          %s210 = sand.u32 %s28, 1
          %s211 = smul.addr %s210, 12
          %s212 = scalar_lea.vmem [#allocation2], %s211
          %s213 = smul.u32 3, %s18
          %s215 = ssub.s32 192, 192
          %216 = vsyncadd %s209, %s215
          %s217 = smul.addr %s213, 64
          %s218 = scalar_lea.hbm %s0, %s217
          %s219 = sshll.u32 %s212, 4
          %s220 = int_to_ptr.vmem [resolvable:$true] %s219
          %225 = dma.hbm_to_vmem [thread:$0]  %s218, 192, %s220, %s209, 64, 64, 4
        $region36: #{tpu_custom_call.1} parent=31 // pred_fallthru
          _
      $region32: #{tpu_custom_call.1} parent=5 // pred_fallthru
        _
      %p226 = scmp.le.s32.totalorder 1, %s18
      %p227 = scmp.lt.s32.totalorder %s18, 3
      %p228 = pnand %p226, %p227
      %p229 = pneg %p228
      // Predicated region
      $region37: #{tpu_custom_call.1} parent=5 // pred_check
        _
      $region38: #{tpu_custom_call.1} parent=5 // pred_check_branch
        %231 = sbr.rel (%p228) target = $region40
      $region39: #{tpu_custom_call.1} parent=5 // pred_region
        %s232 = ssub.s32 %s18, 1
        %s233 = sand.u32 %s31, 1
        %s234 = scalar_lea.sflag [#allocation3], %s233
        %s235 = sand.u32 %s31, 1
        %s236 = smul.addr %s235, 12
        %s237 = scalar_lea.vmem [#allocation2], %s236
        // Predicated region
        $region41: #{tpu_custom_call.1} parent=39 // pred_check
          %p238 = pneg %p44
        $region42: #{tpu_custom_call.1} parent=39 // pred_check_branch
          %240 = sbr.rel (%p238) target = $region44
        $region43: #{tpu_custom_call.1} parent=39 // pred_region
          %241 = dma.done %s234, 192
        $region44: #{tpu_custom_call.1} parent=39 // pred_fallthru
          _
        // Predicated region
        $region45: #{tpu_custom_call.1} parent=39 // pred_check
          %p242 = pneg %p65
        $region46: #{tpu_custom_call.1} parent=39 // pred_check_branch
          %244 = sbr.rel (%p242) target = $region48
        $region47: #{tpu_custom_call.1} parent=39 // pred_region
          %245 = dma.done [#allocation6], 3072
        $region48: #{tpu_custom_call.1} parent=39 // pred_fallthru
          _
        // Predicated region
        $region49: #{tpu_custom_call.1} parent=39 // pred_check
          %p246 = pneg %p86
        $region50: #{tpu_custom_call.1} parent=39 // pred_check_branch
          %248 = sbr.rel (%p246) target = $region52
        $region51: #{tpu_custom_call.1} parent=39 // pred_region
          %249 = dma.done [#allocation6], 3072
        $region52: #{tpu_custom_call.1} parent=39 // pred_fallthru
          _
        %s250 = sand.u32 %s31, 1
        %s251 = scalar_lea.sflag [#allocation3], %s250
        %s252 = sand.u32 %s31, 1
        %s253 = smul.addr %s252, 12
        %s254 = scalar_lea.vmem [#allocation2], %s253
        %p255 = pneg %p44
        %p256 = pneg %p41
        %p257 = pneg %p65
        %p258 = pneg %p62
        %p259 = pneg %p86
        %p260 = pneg %p83
        %p261 = pneg %p107
        %p262 = pneg %p104
        %p263 = pneg %p128
        %p264 = pneg %p125
        %p265 = pneg %p154
        %p266 = pneg %p151
        %s267 = sand.u32 %s141, 1
        %s268 = scalar_lea.sflag [#allocation4], %s267
        %s269 = sand.u32 %s141, 1
        %s270 = smul.addr %s269, 12
        %s271 = scalar_lea.vmem [#allocation8], %s270
        %s272 = smul.u32 3, %s23
        %s273 = smul.u32 3, %s23
        %v275 = vld [vmem:[%s237] sm:$0xf]
        %v276 = vld [vmem:[%s237 + $0x4] sm:$0xf]
        %v277 = vld [vmem:[%s237 + $0x8] sm:$0xf]
        %v278 = vlaneseq
        %v279 = vshrl.u32 %v278, 7
        %v280 = vadd.s32 %v279, 8
        %v281 = vadd.s32 %v279, 16
        %vm282 = vcmp.lt.s32.totalorder %v279, 0
        %v283 = vsub.s32 0, %v279
        %v284 = vsel %vm282, %v283, %v279
        %v285 = vmul.u32.u64.compose %v284, 2863311531
        %v286 = vextract.low.u32 %v285
        %v287 = vextract.high.u32 %v285
        %v288 = vshrl.u32 %v287, 4
        %v289 = vmul.u32 %v288, 24
        %v290 = vsub.s32 %v284, %v289
        %v291 = vsub.s32 0, %v290
        %v292 = vsel %vm282, %v291, %v290
        %vm293 = vcmp.lt.s32.totalorder %v280, 0
        %v294 = vsub.s32 0, %v280
        %v295 = vsel %vm293, %v294, %v280
        %v296 = vmul.u32.u64.compose %v295, 2863311531
        %v297 = vextract.low.u32 %v296
        %v298 = vextract.high.u32 %v296
        %v299 = vshrl.u32 %v298, 4
        %v300 = vmul.u32 %v299, 24
        %v301 = vsub.s32 %v295, %v300
        %v302 = vsub.s32 0, %v301
        %v303 = vsel %vm293, %v302, %v301
        %vm304 = vcmp.lt.s32.totalorder %v281, 0
        %v305 = vsub.s32 0, %v281
        %v306 = vsel %vm304, %v305, %v281
        %v307 = vmul.u32.u64.compose %v306, 2863311531
        %v308 = vextract.low.u32 %v307
        %v309 = vextract.high.u32 %v307
        %v310 = vshrl.u32 %v309, 4
        %v311 = vmul.u32 %v310, 24
        %v312 = vsub.s32 %v306, %v311
        %v313 = vsub.s32 0, %v312
        %v314 = vsel %vm304, %v313, %v312
        %vm315 = vcmp.ne.s32.totalorder %v292, 0
        %vm316 = vcmp.ne.s32.totalorder %v303, 0
        %vm317 = vcmp.ne.s32.totalorder %v314, 0
        %vm318 = vcmp.lt.s32.totalorder %v292, 0
        %vm319 = vcmp.lt.s32.totalorder %v303, 0
        %vm320 = vcmp.lt.s32.totalorder %v314, 0
        %vm321 = vmand %vm318, %vm315
        %vm322 = vmand %vm319, %vm316
        %vm323 = vmand %vm320, %vm317
        %v324 = vadd.s32 %v292, 24
        %v325 = vadd.s32 %v303, 24
        %v326 = vadd.s32 %v314, 24
        %v327 = vsel %vm321, %v324, %v292
        %v328 = vsel %vm322, %v325, %v303
        %v329 = vsel %vm323, %v326, %v314
        %vm330 = vcmp.ge.s32.totalorder %v327, 1
        %vm331 = vcmp.ge.s32.totalorder %v328, 1
        %vm332 = vcmp.ge.s32.totalorder %v329, 1
        %vm333 = vcmp.le.s32.totalorder %v327, 16
        %vm334 = vcmp.le.s32.totalorder %v328, 16
        %vm335 = vcmp.le.s32.totalorder %v329, 16
        %vm336 = vmand %vm330, %vm333
        %vm337 = vmand %vm331, %vm334
        %vm338 = vmand %vm332, %vm335
        %v339 = vld [vmem:[#allocation5] sm:$0xf]
        %v340 = vld [vmem:[#allocation5 + $0x4] sm:$0xf]
        %v341 = vld [vmem:[#allocation5 + $0x8] sm:$0xf]
        %v342 = vld [vmem:[#allocation5 + $0xc] sm:$0xf]
        %v343 = vld [vmem:[#allocation5 + $0x10] sm:$0xf]
        %v344 = vld [vmem:[#allocation5 + $0x14] sm:$0xf]
        %v345 = vld [vmem:[#allocation5 + $0x18] sm:$0xf]
        %v346 = vld [vmem:[#allocation5 + $0x1c] sm:$0xf]
        %v347 = vld [vmem:[#allocation5 + $0x20] sm:$0xf]
        %v348 = vld [vmem:[#allocation5 + $0x24] sm:$0xf]
        %v349 = vld [vmem:[#allocation5 + $0x28] sm:$0xf]
        %v350 = vld [vmem:[#allocation5 + $0x2c] sm:$0xf]
        %v351 = vld [vmem:[#allocation5 + $0x30] sm:$0xf]
        %v352 = vld [vmem:[#allocation5 + $0x34] sm:$0xf]
        %v353 = vld [vmem:[#allocation5 + $0x38] sm:$0xf]
        %v354 = vld [vmem:[#allocation5 + $0x3c] sm:$0xf]
        %v358 = vunpack.c.l.b16 %v275
        %v359 = vunpack.c.l.b16 %v276
        %v360 = vunpack.c.l.b16 %v277
        %v361 = vpack.c.b16 %v359, %v358
        %v362 = vpack.c.b16 %v360, %v360
        %v381 = vunpack.c.l.b16 %v339
        %v382 = vunpack.c.l.b16 %v340
        %v383 = vunpack.c.l.b16 %v341
        %v384 = vunpack.c.l.b16 %v342
        %v385 = vunpack.c.l.b16 %v343
        %v386 = vunpack.c.l.b16 %v344
        %v387 = vunpack.c.l.b16 %v345
        %v388 = vunpack.c.l.b16 %v346
        %v389 = vunpack.c.l.b16 %v347
        %v390 = vunpack.c.l.b16 %v348
        %v391 = vunpack.c.l.b16 %v349
        %v392 = vunpack.c.l.b16 %v350
        %v393 = vunpack.c.l.b16 %v351
        %v394 = vunpack.c.l.b16 %v352
        %v395 = vunpack.c.l.b16 %v353
        %v396 = vunpack.c.l.b16 %v354
        %v397 = vpack.c.b16 %v382, %v381
        %v398 = vpack.c.b16 %v384, %v383
        %v399 = vpack.c.b16 %v386, %v385
        %v400 = vpack.c.b16 %v388, %v387
        %v401 = vpack.c.b16 %v390, %v389
        %v402 = vpack.c.b16 %v392, %v391
        %v403 = vpack.c.b16 %v394, %v393
        %v404 = vpack.c.b16 %v396, %v395
        %413 = vmatprep.subr.bf16.mxu0 0
        %414 = vmatpush1.bf16.msra.mxu0 %v404
        %415 = vmatprep.subr.bf16.mxu0 0
        %416 = vmatpush1.bf16.msra.mxu0 %v403
        %417 = vmatprep.subr.bf16.mxu0 0
        %418 = vmatpush1.bf16.msra.mxu0 %v402
        %419 = vmatprep.subr.bf16.mxu0 0
        %420 = vmatpush1.bf16.msra.mxu0 %v401
        %421 = vmatprep.subr.bf16.mxu0 0
        %422 = vmatpush1.bf16.msra.mxu0 %v400
        %423 = vmatprep.subr.bf16.mxu0 0
        %424 = vmatpush1.bf16.msra.mxu0 %v399
        %425 = vmatprep.subr.bf16.mxu0 0
        %426 = vmatpush1.bf16.msra.mxu0 %v398
        %427 = vmatprep.subr.bf16.mxu0 0
        %428 = vmatpush1.bf16.msra.mxu0 %v397
        %429 = vmatprep.subr.bf16.mxu0 0
        %430 = vmatpush2.bf16.msra.mxu0 0
        %431 = vmatprep.subr.bf16.mxu0 0
        %432 = vmatpush2.bf16.msra.mxu0 0
        %433 = vmatprep.subr.bf16.mxu0 0
        %434 = vmatpush2.bf16.msra.mxu0 0
        %435 = vmatprep.subr.bf16.mxu0 0
        %436 = vmatpush2.bf16.msra.mxu0 0
        %437 = vmatprep.subr.bf16.mxu0 0
        %438 = vmatpush2.bf16.msra.mxu0 0
        %439 = vmatprep.subr.bf16.mxu0 0
        %440 = vmatpush2.bf16.msra.mxu0 0
        %441 = vmatprep.subr.bf16.mxu0 0
        %442 = vmatpush2.bf16.msra.mxu0 0
        %443 = vmatprep.subr.bf16.mxu0 0
        %444 = vmatpush2.bf16.msra.mxu0 0
        %445 = vmatprep.mubr.bf16.mxu0 0
        %446 = vmatmul.mubr.bf16.gmra.mxu0 %v361
        %v447 = vpop.f32.mrf.mxu0
        %v448 = vadd.f32 0.0, %v447
        %v449 = vpop.f32.mrf.mxu0
        %v450 = vpop.f32.mrf.mxu0
        %v451 = vadd.f32 0.0, %v450
        %v452 = vpop.f32.mrf.mxu0
        %453 = vmatprep.mubr.bf16.mxu0 0
        %454 = vmatmul.mubr.bf16.gmra.mxu0 %v362
        %v455 = vpop.f32.mrf.mxu0
        %v456 = vadd.f32 0.0, %v455
        %v457 = vpop.f32.mrf.mxu0
        %v458 = vpop.f32.mrf.mxu0
        %v459 = vpop.f32.mrf.mxu0
        %460 = vdwg.mxu0
        %s461 = scalar_lea.vmem [#allocation5], 64
        %v462 = vld [vmem:[%s461] sm:$0xf]
        %v463 = vld [vmem:[%s461 + $0x4] sm:$0xf]
        %v464 = vld [vmem:[%s461 + $0x8] sm:$0xf]
        %v465 = vld [vmem:[%s461 + $0xc] sm:$0xf]
        %v466 = vld [vmem:[%s461 + $0x10] sm:$0xf]
        %v467 = vld [vmem:[%s461 + $0x14] sm:$0xf]
        %v468 = vld [vmem:[%s461 + $0x18] sm:$0xf]
        %v469 = vld [vmem:[%s461 + $0x1c] sm:$0xf]
        %v470 = vld [vmem:[%s461 + $0x20] sm:$0xf]
        %v471 = vld [vmem:[%s461 + $0x24] sm:$0xf]
        %v472 = vld [vmem:[%s461 + $0x28] sm:$0xf]
        %v473 = vld [vmem:[%s461 + $0x2c] sm:$0xf]
        %v474 = vld [vmem:[%s461 + $0x30] sm:$0xf]
        %v475 = vld [vmem:[%s461 + $0x34] sm:$0xf]
        %v476 = vld [vmem:[%s461 + $0x38] sm:$0xf]
        %v477 = vld [vmem:[%s461 + $0x3c] sm:$0xf]
        %v494 = vunpack.c.l.b16 %v462
        %v495 = vunpack.c.l.b16 %v463
        %v496 = vunpack.c.l.b16 %v464
        %v497 = vunpack.c.l.b16 %v465
        %v498 = vunpack.c.l.b16 %v466
        %v499 = vunpack.c.l.b16 %v467
        %v500 = vunpack.c.l.b16 %v468
        %v501 = vunpack.c.l.b16 %v469
        %v502 = vunpack.c.l.b16 %v470
        %v503 = vunpack.c.l.b16 %v471
        %v504 = vunpack.c.l.b16 %v472
        %v505 = vunpack.c.l.b16 %v473
        %v506 = vunpack.c.l.b16 %v474
        %v507 = vunpack.c.l.b16 %v475
        %v508 = vunpack.c.l.b16 %v476
        %v509 = vunpack.c.l.b16 %v477
        %v510 = vpack.c.b16 %v495, %v494
        %v511 = vpack.c.b16 %v497, %v496
        %v512 = vpack.c.b16 %v499, %v498
        %v513 = vpack.c.b16 %v501, %v500
        %v514 = vpack.c.b16 %v503, %v502
        %v515 = vpack.c.b16 %v505, %v504
        %v516 = vpack.c.b16 %v507, %v506
        %v517 = vpack.c.b16 %v509, %v508
        %526 = vmatprep.subr.bf16.mxu0 0
        %527 = vmatpush1.bf16.msra.mxu0 %v517
        %528 = vmatprep.subr.bf16.mxu0 0
        %529 = vmatpush1.bf16.msra.mxu0 %v516
        %530 = vmatprep.subr.bf16.mxu0 0
        %531 = vmatpush1.bf16.msra.mxu0 %v515
        %532 = vmatprep.subr.bf16.mxu0 0
        %533 = vmatpush1.bf16.msra.mxu0 %v514
        %534 = vmatprep.subr.bf16.mxu0 0
        %535 = vmatpush1.bf16.msra.mxu0 %v513
        %536 = vmatprep.subr.bf16.mxu0 0
        %537 = vmatpush1.bf16.msra.mxu0 %v512
        %538 = vmatprep.subr.bf16.mxu0 0
        %539 = vmatpush1.bf16.msra.mxu0 %v511
        %540 = vmatprep.subr.bf16.mxu0 0
        %541 = vmatpush1.bf16.msra.mxu0 %v510
        %542 = vmatprep.subr.bf16.mxu0 0
        %543 = vmatpush2.bf16.msra.mxu0 0
        %544 = vmatprep.subr.bf16.mxu0 0
        %545 = vmatpush2.bf16.msra.mxu0 0
        %546 = vmatprep.subr.bf16.mxu0 0
        %547 = vmatpush2.bf16.msra.mxu0 0
        %548 = vmatprep.subr.bf16.mxu0 0
        %549 = vmatpush2.bf16.msra.mxu0 0
        %550 = vmatprep.subr.bf16.mxu0 0
        %551 = vmatpush2.bf16.msra.mxu0 0
        %552 = vmatprep.subr.bf16.mxu0 0
        %553 = vmatpush2.bf16.msra.mxu0 0
        %554 = vmatprep.subr.bf16.mxu0 0
        %555 = vmatpush2.bf16.msra.mxu0 0
        %556 = vmatprep.subr.bf16.mxu0 0
        %557 = vmatpush2.bf16.msra.mxu0 0
        %558 = vmatprep.mubr.bf16.mxu0 0
        %559 = vmatmul.mubr.bf16.gmra.mxu0 %v361
        %v560 = vpop.f32.mrf.mxu0
        %v561 = vadd.f32 0.0, %v560
        %v562 = vpop.f32.mrf.mxu0
        %v563 = vpop.f32.mrf.mxu0
        %v564 = vadd.f32 0.0, %v563
        %v565 = vpop.f32.mrf.mxu0
        %566 = vmatprep.mubr.bf16.mxu0 0
        %567 = vmatmul.mubr.bf16.gmra.mxu0 %v362
        %v568 = vpop.f32.mrf.mxu0
        %v569 = vadd.f32 0.0, %v568
        %v570 = vpop.f32.mrf.mxu0
        %v571 = vpop.f32.mrf.mxu0
        %v572 = vpop.f32.mrf.mxu0
        %573 = vdwg.mxu0
        %s574 = scalar_lea.vmem [#allocation5], 128
        %v575 = vld [vmem:[%s574] sm:$0xf]
        %v576 = vld [vmem:[%s574 + $0x4] sm:$0xf]
        %v577 = vld [vmem:[%s574 + $0x8] sm:$0xf]
        %v578 = vld [vmem:[%s574 + $0xc] sm:$0xf]
        %v579 = vld [vmem:[%s574 + $0x10] sm:$0xf]
        %v580 = vld [vmem:[%s574 + $0x14] sm:$0xf]
        %v581 = vld [vmem:[%s574 + $0x18] sm:$0xf]
        %v582 = vld [vmem:[%s574 + $0x1c] sm:$0xf]
        %v583 = vld [vmem:[%s574 + $0x20] sm:$0xf]
        %v584 = vld [vmem:[%s574 + $0x24] sm:$0xf]
        %v585 = vld [vmem:[%s574 + $0x28] sm:$0xf]
        %v586 = vld [vmem:[%s574 + $0x2c] sm:$0xf]
        %v587 = vld [vmem:[%s574 + $0x30] sm:$0xf]
        %v588 = vld [vmem:[%s574 + $0x34] sm:$0xf]
        %v589 = vld [vmem:[%s574 + $0x38] sm:$0xf]
        %v590 = vld [vmem:[%s574 + $0x3c] sm:$0xf]
        %v607 = vunpack.c.l.b16 %v575
        %v608 = vunpack.c.l.b16 %v576
        %v609 = vunpack.c.l.b16 %v577
        %v610 = vunpack.c.l.b16 %v578
        %v611 = vunpack.c.l.b16 %v579
        %v612 = vunpack.c.l.b16 %v580
        %v613 = vunpack.c.l.b16 %v581
        %v614 = vunpack.c.l.b16 %v582
        %v615 = vunpack.c.l.b16 %v583
        %v616 = vunpack.c.l.b16 %v584
        %v617 = vunpack.c.l.b16 %v585
        %v618 = vunpack.c.l.b16 %v586
        %v619 = vunpack.c.l.b16 %v587
        %v620 = vunpack.c.l.b16 %v588
        %v621 = vunpack.c.l.b16 %v589
        %v622 = vunpack.c.l.b16 %v590
        %v623 = vpack.c.b16 %v608, %v607
        %v624 = vpack.c.b16 %v610, %v609
        %v625 = vpack.c.b16 %v612, %v611
        %v626 = vpack.c.b16 %v614, %v613
        %v627 = vpack.c.b16 %v616, %v615
        %v628 = vpack.c.b16 %v618, %v617
        %v629 = vpack.c.b16 %v620, %v619
        %v630 = vpack.c.b16 %v622, %v621
        %639 = vmatprep.subr.bf16.mxu0 0
        %640 = vmatpush1.bf16.msra.mxu0 %v630
        %641 = vmatprep.subr.bf16.mxu0 0
        %642 = vmatpush1.bf16.msra.mxu0 %v629
        %643 = vmatprep.subr.bf16.mxu0 0
        %644 = vmatpush1.bf16.msra.mxu0 %v628
        %645 = vmatprep.subr.bf16.mxu0 0
        %646 = vmatpush1.bf16.msra.mxu0 %v627
        %647 = vmatprep.subr.bf16.mxu0 0
        %648 = vmatpush1.bf16.msra.mxu0 %v626
        %649 = vmatprep.subr.bf16.mxu0 0
        %650 = vmatpush1.bf16.msra.mxu0 %v625
        %651 = vmatprep.subr.bf16.mxu0 0
        %652 = vmatpush1.bf16.msra.mxu0 %v624
        %653 = vmatprep.subr.bf16.mxu0 0
        %654 = vmatpush1.bf16.msra.mxu0 %v623
        %655 = vmatprep.subr.bf16.mxu0 0
        %656 = vmatpush2.bf16.msra.mxu0 0
        %657 = vmatprep.subr.bf16.mxu0 0
        %658 = vmatpush2.bf16.msra.mxu0 0
        %659 = vmatprep.subr.bf16.mxu0 0
        %660 = vmatpush2.bf16.msra.mxu0 0
        %661 = vmatprep.subr.bf16.mxu0 0
        %662 = vmatpush2.bf16.msra.mxu0 0
        %663 = vmatprep.subr.bf16.mxu0 0
        %664 = vmatpush2.bf16.msra.mxu0 0
        %665 = vmatprep.subr.bf16.mxu0 0
        %666 = vmatpush2.bf16.msra.mxu0 0
        %667 = vmatprep.subr.bf16.mxu0 0
        %668 = vmatpush2.bf16.msra.mxu0 0
        %669 = vmatprep.subr.bf16.mxu0 0
        %670 = vmatpush2.bf16.msra.mxu0 0
        %671 = vmatprep.mubr.bf16.mxu0 0
        %672 = vmatmul.mubr.bf16.gmra.mxu0 %v361
        %v673 = vpop.f32.mrf.mxu0
        %v674 = vadd.f32 0.0, %v673
        %v675 = vpop.f32.mrf.mxu0
        %v676 = vpop.f32.mrf.mxu0
        %v677 = vadd.f32 0.0, %v676
        %v678 = vpop.f32.mrf.mxu0
        %679 = vmatprep.mubr.bf16.mxu0 0
        %680 = vmatmul.mubr.bf16.gmra.mxu0 %v362
        %v681 = vpop.f32.mrf.mxu0
        %v682 = vadd.f32 0.0, %v681
        %v683 = vpop.f32.mrf.mxu0
        %v684 = vpop.f32.mrf.mxu0
        %v685 = vpop.f32.mrf.mxu0
        %686 = vdwg.mxu0
        %v687 = vrot.slane %v448, 7
        %v688 = vrot.slane %v451, 7
        %v689 = vrot.slane %v456, 7
        %vm690 = vcmp.lt.s32.totalorder %v279, 1
        %v691 = vsel %vm690, %v688, %v689
        %v692 = vsel %vm690, %v687, %v688
        %v693 = vsel %vm690, %v689, %v687
        %v694 = vadd.f32 %v693, %v561
        %v695 = vadd.f32 %v692, %v564
        %v696 = vadd.f32 %v691, %v569
        %v697 = vrot.slane %v674, 1
        %v698 = vrot.slane %v677, 1
        %v699 = vrot.slane %v682, 1
        %vm700 = vcmp.lt.s32.totalorder %v279, 7
        %v701 = vsel %vm700, %v698, %v699
        %v702 = vsel %vm700, %v697, %v698
        %v703 = vsel %vm700, %v699, %v697
        %v704 = vadd.f32 %v694, %v702
        %v705 = vadd.f32 %v695, %v701
        %v706 = vadd.f32 %v696, %v703
        %v707 = vld [vmem:[%s3] sm:$0x1]
        %v709 = vlaneseq
        %v710 = vshrl.u32 %v709, 7
        %v711 = vsub.s32 0, %v710
        %v712 = vrot.slane %v707, %v711
        %v714 = vadd.f32 %v704, %v712
        %v715 = vadd.f32 %v705, %v712
        %v716 = vadd.f32 %v706, %v712
        %v717 = vmax.f32 %v714, 0.0
        %v718 = vmax.f32 %v715, 0.0
        %v719 = vmax.f32 %v716, 0.0
        %v720 = vsel %vm336, 1, 0
        %v721 = vsel %vm337, 1, 0
        %v722 = vsel %vm338, 1, 0
        %vm723 = vcmp.eq.s32.totalorder %v720, 1
        %vm724 = vcmp.eq.s32.totalorder %v721, 1
        %vm725 = vcmp.eq.s32.totalorder %v722, 1
        %v726 = vsel %vm723, %v717, 0.0
        %v727 = vsel %vm724, %v718, 0.0
        %v728 = vsel %vm725, %v719, 0.0
        %v729 = vpack.c.bf16 %v727, %v726
        %v730 = vpack.c.bf16 %v728, %v728
        %v731 = vld [vmem:[#allocation7] sm:$0xf]
        %v732 = vld [vmem:[#allocation7 + $0x4] sm:$0xf]
        %v733 = vld [vmem:[#allocation7 + $0x8] sm:$0xf]
        %v734 = vld [vmem:[#allocation7 + $0xc] sm:$0xf]
        %v735 = vld [vmem:[#allocation7 + $0x10] sm:$0xf]
        %v736 = vld [vmem:[#allocation7 + $0x14] sm:$0xf]
        %v737 = vld [vmem:[#allocation7 + $0x18] sm:$0xf]
        %v738 = vld [vmem:[#allocation7 + $0x1c] sm:$0xf]
        %v739 = vld [vmem:[#allocation7 + $0x20] sm:$0xf]
        %v740 = vld [vmem:[#allocation7 + $0x24] sm:$0xf]
        %v741 = vld [vmem:[#allocation7 + $0x28] sm:$0xf]
        %v742 = vld [vmem:[#allocation7 + $0x2c] sm:$0xf]
        %v743 = vld [vmem:[#allocation7 + $0x30] sm:$0xf]
        %v744 = vld [vmem:[#allocation7 + $0x34] sm:$0xf]
        %v745 = vld [vmem:[#allocation7 + $0x38] sm:$0xf]
        %v746 = vld [vmem:[#allocation7 + $0x3c] sm:$0xf]
        %v763 = vunpack.c.l.b16 %v731
        %v764 = vunpack.c.l.b16 %v732
        %v765 = vunpack.c.l.b16 %v733
        %v766 = vunpack.c.l.b16 %v734
        %v767 = vunpack.c.l.b16 %v735
        %v768 = vunpack.c.l.b16 %v736
        %v769 = vunpack.c.l.b16 %v737
        %v770 = vunpack.c.l.b16 %v738
        %v771 = vunpack.c.l.b16 %v739
        %v772 = vunpack.c.l.b16 %v740
        %v773 = vunpack.c.l.b16 %v741
        %v774 = vunpack.c.l.b16 %v742
        %v775 = vunpack.c.l.b16 %v743
        %v776 = vunpack.c.l.b16 %v744
        %v777 = vunpack.c.l.b16 %v745
        %v778 = vunpack.c.l.b16 %v746
        %v779 = vpack.c.b16 %v764, %v763
        %v780 = vpack.c.b16 %v766, %v765
        %v781 = vpack.c.b16 %v768, %v767
        %v782 = vpack.c.b16 %v770, %v769
        %v783 = vpack.c.b16 %v772, %v771
        %v784 = vpack.c.b16 %v774, %v773
        %v785 = vpack.c.b16 %v776, %v775
        %v786 = vpack.c.b16 %v778, %v777
        %795 = vmatprep.subr.bf16.mxu0 0
        %796 = vmatpush1.bf16.msra.mxu0 %v786
        %797 = vmatprep.subr.bf16.mxu0 0
        %798 = vmatpush1.bf16.msra.mxu0 %v785
        %799 = vmatprep.subr.bf16.mxu0 0
        %800 = vmatpush1.bf16.msra.mxu0 %v784
        %801 = vmatprep.subr.bf16.mxu0 0
        %802 = vmatpush1.bf16.msra.mxu0 %v783
        %803 = vmatprep.subr.bf16.mxu0 0
        %804 = vmatpush1.bf16.msra.mxu0 %v782
        %805 = vmatprep.subr.bf16.mxu0 0
        %806 = vmatpush1.bf16.msra.mxu0 %v781
        %807 = vmatprep.subr.bf16.mxu0 0
        %808 = vmatpush1.bf16.msra.mxu0 %v780
        %809 = vmatprep.subr.bf16.mxu0 0
        %810 = vmatpush1.bf16.msra.mxu0 %v779
        %811 = vmatprep.subr.bf16.mxu0 0
        %812 = vmatpush2.bf16.msra.mxu0 0
        %813 = vmatprep.subr.bf16.mxu0 0
        %814 = vmatpush2.bf16.msra.mxu0 0
        %815 = vmatprep.subr.bf16.mxu0 0
        %816 = vmatpush2.bf16.msra.mxu0 0
        %817 = vmatprep.subr.bf16.mxu0 0
        %818 = vmatpush2.bf16.msra.mxu0 0
        %819 = vmatprep.subr.bf16.mxu0 0
        %820 = vmatpush2.bf16.msra.mxu0 0
        %821 = vmatprep.subr.bf16.mxu0 0
        %822 = vmatpush2.bf16.msra.mxu0 0
        %823 = vmatprep.subr.bf16.mxu0 0
        %824 = vmatpush2.bf16.msra.mxu0 0
        %825 = vmatprep.subr.bf16.mxu0 0
        %826 = vmatpush2.bf16.msra.mxu0 0
        %827 = vmatprep.mubr.bf16.mxu0 0
        %828 = vmatmul.mubr.bf16.gmra.mxu0 %v729
        %v829 = vpop.f32.mrf.mxu0
        %v830 = vadd.f32 0.0, %v829
        %v831 = vpop.f32.mrf.mxu0
        %v832 = vpop.f32.mrf.mxu0
        %v833 = vadd.f32 0.0, %v832
        %v834 = vpop.f32.mrf.mxu0
        %835 = vmatprep.mubr.bf16.mxu0 0
        %836 = vmatmul.mubr.bf16.gmra.mxu0 %v730
        %v837 = vpop.f32.mrf.mxu0
        %v838 = vadd.f32 0.0, %v837
        %v839 = vpop.f32.mrf.mxu0
        %v840 = vpop.f32.mrf.mxu0
        %v841 = vpop.f32.mrf.mxu0
        %842 = vdwg.mxu0
        %s843 = scalar_lea.vmem [#allocation7], 64
        %v844 = vld [vmem:[%s843] sm:$0xf]
        %v845 = vld [vmem:[%s843 + $0x4] sm:$0xf]
        %v846 = vld [vmem:[%s843 + $0x8] sm:$0xf]
        %v847 = vld [vmem:[%s843 + $0xc] sm:$0xf]
        %v848 = vld [vmem:[%s843 + $0x10] sm:$0xf]
        %v849 = vld [vmem:[%s843 + $0x14] sm:$0xf]
        %v850 = vld [vmem:[%s843 + $0x18] sm:$0xf]
        %v851 = vld [vmem:[%s843 + $0x1c] sm:$0xf]
        %v852 = vld [vmem:[%s843 + $0x20] sm:$0xf]
        %v853 = vld [vmem:[%s843 + $0x24] sm:$0xf]
        %v854 = vld [vmem:[%s843 + $0x28] sm:$0xf]
        %v855 = vld [vmem:[%s843 + $0x2c] sm:$0xf]
        %v856 = vld [vmem:[%s843 + $0x30] sm:$0xf]
        %v857 = vld [vmem:[%s843 + $0x34] sm:$0xf]
        %v858 = vld [vmem:[%s843 + $0x38] sm:$0xf]
        %v859 = vld [vmem:[%s843 + $0x3c] sm:$0xf]
        %v876 = vunpack.c.l.b16 %v844
        %v877 = vunpack.c.l.b16 %v845
        %v878 = vunpack.c.l.b16 %v846
        %v879 = vunpack.c.l.b16 %v847
        %v880 = vunpack.c.l.b16 %v848
        %v881 = vunpack.c.l.b16 %v849
        %v882 = vunpack.c.l.b16 %v850
        %v883 = vunpack.c.l.b16 %v851
        %v884 = vunpack.c.l.b16 %v852
        %v885 = vunpack.c.l.b16 %v853
        %v886 = vunpack.c.l.b16 %v854
        %v887 = vunpack.c.l.b16 %v855
        %v888 = vunpack.c.l.b16 %v856
        %v889 = vunpack.c.l.b16 %v857
        %v890 = vunpack.c.l.b16 %v858
        %v891 = vunpack.c.l.b16 %v859
        %v892 = vpack.c.b16 %v877, %v876
        %v893 = vpack.c.b16 %v879, %v878
        %v894 = vpack.c.b16 %v881, %v880
        %v895 = vpack.c.b16 %v883, %v882
        %v896 = vpack.c.b16 %v885, %v884
        %v897 = vpack.c.b16 %v887, %v886
        %v898 = vpack.c.b16 %v889, %v888
        %v899 = vpack.c.b16 %v891, %v890
        %908 = vmatprep.subr.bf16.mxu0 0
        %909 = vmatpush1.bf16.msra.mxu0 %v899
        %910 = vmatprep.subr.bf16.mxu0 0
        %911 = vmatpush1.bf16.msra.mxu0 %v898
        %912 = vmatprep.subr.bf16.mxu0 0
        %913 = vmatpush1.bf16.msra.mxu0 %v897
        %914 = vmatprep.subr.bf16.mxu0 0
        %915 = vmatpush1.bf16.msra.mxu0 %v896
        %916 = vmatprep.subr.bf16.mxu0 0
        %917 = vmatpush1.bf16.msra.mxu0 %v895
        %918 = vmatprep.subr.bf16.mxu0 0
        %919 = vmatpush1.bf16.msra.mxu0 %v894
        %920 = vmatprep.subr.bf16.mxu0 0
        %921 = vmatpush1.bf16.msra.mxu0 %v893
        %922 = vmatprep.subr.bf16.mxu0 0
        %923 = vmatpush1.bf16.msra.mxu0 %v892
        %924 = vmatprep.subr.bf16.mxu0 0
        %925 = vmatpush2.bf16.msra.mxu0 0
        %926 = vmatprep.subr.bf16.mxu0 0
        %927 = vmatpush2.bf16.msra.mxu0 0
        %928 = vmatprep.subr.bf16.mxu0 0
        %929 = vmatpush2.bf16.msra.mxu0 0
        %930 = vmatprep.subr.bf16.mxu0 0
        %931 = vmatpush2.bf16.msra.mxu0 0
        %932 = vmatprep.subr.bf16.mxu0 0
        %933 = vmatpush2.bf16.msra.mxu0 0
        %934 = vmatprep.subr.bf16.mxu0 0
        %935 = vmatpush2.bf16.msra.mxu0 0
        %936 = vmatprep.subr.bf16.mxu0 0
        %937 = vmatpush2.bf16.msra.mxu0 0
        %938 = vmatprep.subr.bf16.mxu0 0
        %939 = vmatpush2.bf16.msra.mxu0 0
        %940 = vmatprep.mubr.bf16.mxu0 0
        %941 = vmatmul.mubr.bf16.gmra.mxu0 %v729
        %v942 = vpop.f32.mrf.mxu0
        %v943 = vadd.f32 0.0, %v942
        %v944 = vpop.f32.mrf.mxu0
        %v945 = vpop.f32.mrf.mxu0
        %v946 = vadd.f32 0.0, %v945
        %v947 = vpop.f32.mrf.mxu0
        %948 = vmatprep.mubr.bf16.mxu0 0
        %949 = vmatmul.mubr.bf16.gmra.mxu0 %v730
        %v950 = vpop.f32.mrf.mxu0
        %v951 = vadd.f32 0.0, %v950
        %v952 = vpop.f32.mrf.mxu0
        %v953 = vpop.f32.mrf.mxu0
        %v954 = vpop.f32.mrf.mxu0
        %955 = vdwg.mxu0
        %s956 = scalar_lea.vmem [#allocation7], 128
        %v957 = vld [vmem:[%s956] sm:$0xf]
        %v958 = vld [vmem:[%s956 + $0x4] sm:$0xf]
        %v959 = vld [vmem:[%s956 + $0x8] sm:$0xf]
        %v960 = vld [vmem:[%s956 + $0xc] sm:$0xf]
        %v961 = vld [vmem:[%s956 + $0x10] sm:$0xf]
        %v962 = vld [vmem:[%s956 + $0x14] sm:$0xf]
        %v963 = vld [vmem:[%s956 + $0x18] sm:$0xf]
        %v964 = vld [vmem:[%s956 + $0x1c] sm:$0xf]
        %v965 = vld [vmem:[%s956 + $0x20] sm:$0xf]
        %v966 = vld [vmem:[%s956 + $0x24] sm:$0xf]
        %v967 = vld [vmem:[%s956 + $0x28] sm:$0xf]
        %v968 = vld [vmem:[%s956 + $0x2c] sm:$0xf]
        %v969 = vld [vmem:[%s956 + $0x30] sm:$0xf]
        %v970 = vld [vmem:[%s956 + $0x34] sm:$0xf]
        %v971 = vld [vmem:[%s956 + $0x38] sm:$0xf]
        %v972 = vld [vmem:[%s956 + $0x3c] sm:$0xf]
        %v989 = vunpack.c.l.b16 %v957
        %v990 = vunpack.c.l.b16 %v958
        %v991 = vunpack.c.l.b16 %v959
        %v992 = vunpack.c.l.b16 %v960
        %v993 = vunpack.c.l.b16 %v961
        %v994 = vunpack.c.l.b16 %v962
        %v995 = vunpack.c.l.b16 %v963
        %v996 = vunpack.c.l.b16 %v964
        %v997 = vunpack.c.l.b16 %v965
        %v998 = vunpack.c.l.b16 %v966
        %v999 = vunpack.c.l.b16 %v967
        %v1000 = vunpack.c.l.b16 %v968
        %v1001 = vunpack.c.l.b16 %v969
        %v1002 = vunpack.c.l.b16 %v970
        %v1003 = vunpack.c.l.b16 %v971
        %v1004 = vunpack.c.l.b16 %v972
        %v1005 = vpack.c.b16 %v990, %v989
        %v1006 = vpack.c.b16 %v992, %v991
        %v1007 = vpack.c.b16 %v994, %v993
        %v1008 = vpack.c.b16 %v996, %v995
        %v1009 = vpack.c.b16 %v998, %v997
        %v1010 = vpack.c.b16 %v1000, %v999
        %v1011 = vpack.c.b16 %v1002, %v1001
        %v1012 = vpack.c.b16 %v1004, %v1003
        %1021 = vmatprep.subr.bf16.mxu0 0
        %1022 = vmatpush1.bf16.msra.mxu0 %v1012
        %1023 = vmatprep.subr.bf16.mxu0 0
        %1024 = vmatpush1.bf16.msra.mxu0 %v1011
        %1025 = vmatprep.subr.bf16.mxu0 0
        %1026 = vmatpush1.bf16.msra.mxu0 %v1010
        %1027 = vmatprep.subr.bf16.mxu0 0
        %1028 = vmatpush1.bf16.msra.mxu0 %v1009
        %1029 = vmatprep.subr.bf16.mxu0 0
        %1030 = vmatpush1.bf16.msra.mxu0 %v1008
        %1031 = vmatprep.subr.bf16.mxu0 0
        %1032 = vmatpush1.bf16.msra.mxu0 %v1007
        %1033 = vmatprep.subr.bf16.mxu0 0
        %1034 = vmatpush1.bf16.msra.mxu0 %v1006
        %1035 = vmatprep.subr.bf16.mxu0 0
        %1036 = vmatpush1.bf16.msra.mxu0 %v1005
        %1037 = vmatprep.subr.bf16.mxu0 0
        %1038 = vmatpush2.bf16.msra.mxu0 0
        %1039 = vmatprep.subr.bf16.mxu0 0
        %1040 = vmatpush2.bf16.msra.mxu0 0
        %1041 = vmatprep.subr.bf16.mxu0 0
        %1042 = vmatpush2.bf16.msra.mxu0 0
        %1043 = vmatprep.subr.bf16.mxu0 0
        %1044 = vmatpush2.bf16.msra.mxu0 0
        %1045 = vmatprep.subr.bf16.mxu0 0
        %1046 = vmatpush2.bf16.msra.mxu0 0
        %1047 = vmatprep.subr.bf16.mxu0 0
        %1048 = vmatpush2.bf16.msra.mxu0 0
        %1049 = vmatprep.subr.bf16.mxu0 0
        %1050 = vmatpush2.bf16.msra.mxu0 0
        %1051 = vmatprep.subr.bf16.mxu0 0
        %1052 = vmatpush2.bf16.msra.mxu0 0
        %1053 = vmatprep.mubr.bf16.mxu0 0
        %1054 = vmatmul.mubr.bf16.gmra.mxu0 %v729
        %v1055 = vpop.f32.mrf.mxu0
        %v1056 = vadd.f32 0.0, %v1055
        %v1057 = vpop.f32.mrf.mxu0
        %v1058 = vpop.f32.mrf.mxu0
        %v1059 = vadd.f32 0.0, %v1058
        %v1060 = vpop.f32.mrf.mxu0
        %1061 = vmatprep.mubr.bf16.mxu0 0
        %1062 = vmatmul.mubr.bf16.gmra.mxu0 %v730
        %v1063 = vpop.f32.mrf.mxu0
        %v1064 = vadd.f32 0.0, %v1063
        %v1065 = vpop.f32.mrf.mxu0
        %v1066 = vpop.f32.mrf.mxu0
        %v1067 = vpop.f32.mrf.mxu0
        %1068 = vdwg.mxu0
        %v1069 = vrot.slane %v830, 7
        %v1070 = vrot.slane %v833, 7
        %v1071 = vrot.slane %v838, 7
        %v1072 = vsel %vm690, %v1070, %v1071
        %v1073 = vsel %vm690, %v1069, %v1070
        %v1074 = vsel %vm690, %v1071, %v1069
        %v1075 = vadd.f32 %v1074, %v943
        %v1076 = vadd.f32 %v1073, %v946
        %v1077 = vadd.f32 %v1072, %v951
        %v1078 = vrot.slane %v1056, 1
        %v1079 = vrot.slane %v1059, 1
        %v1080 = vrot.slane %v1064, 1
        %v1081 = vsel %vm700, %v1079, %v1080
        %v1082 = vsel %vm700, %v1078, %v1079
        %v1083 = vsel %vm700, %v1080, %v1078
        %v1084 = vadd.f32 %v1075, %v1082
        %v1085 = vadd.f32 %v1076, %v1081
        %v1086 = vadd.f32 %v1077, %v1083
        %v1087 = vld [vmem:[%s4] sm:$0x1]
        %v1089 = vlaneseq
        %v1090 = vshrl.u32 %v1089, 7
        %v1091 = vsub.s32 0, %v1090
        %v1092 = vrot.slane %v1087, %v1091
        %v1094 = vadd.f32 %v1084, %v1092
        %v1095 = vadd.f32 %v1085, %v1092
        %v1096 = vadd.f32 %v1086, %v1092
        %v1097 = vmax.f32 %v1094, 0.0
        %v1098 = vmax.f32 %v1095, 0.0
        %v1099 = vmax.f32 %v1096, 0.0
        %v1100 = vunpack.c.l.bf16 %v275
        %v1101 = vunpack.c.l.bf16 %v276
        %v1102 = vunpack.c.l.bf16 %v277
        %v1103 = vadd.f32 %v1097, %v1100
        %v1104 = vadd.f32 %v1098, %v1101
        %v1105 = vadd.f32 %v1099, %v1102
        %v1106 = vmax.f32 %v1103, 0.0
        %v1107 = vmax.f32 %v1104, 0.0
        %v1108 = vmax.f32 %v1105, 0.0
        %v1109 = vpack.c.bf16 %v1107, %v1106
        %v1110 = vpack.c.bf16 %v1108, %v1108
        %v1113 = vunpack.c.l.b16 %v1109
        %v1114 = vunpack.c.h.b16 %v1109
        %v1115 = vunpack.c.l.b16 %v1110
        %v1116 = vpack.c.b16 %v1113, %v1113
        %v1117 = vpack.c.b16 %v1114, %v1114
        %v1118 = vpack.c.b16 %v1115, %v1115
        %1122 = vst [vmem:[%s271] sm:$0xf] %v1116
        %1123 = vst [vmem:[%s271 + $0x4] sm:$0xf] %v1117
        %1124 = vst [vmem:[%s271 + $0x8] sm:$0xf] %v1118
        %s1125 = sand.u32 %s141, 1
        %s1126 = scalar_lea.sflag [#allocation4], %s1125
        %s1127 = sand.u32 %s141, 1
        %s1128 = smul.addr %s1127, 12
        %s1129 = scalar_lea.vmem [#allocation8], %s1128
        // Predicated region
        $region53: #{tpu_custom_call.1} parent=39 // pred_check
          %p1130 = pneg %p151
        $region54: #{tpu_custom_call.1} parent=39 // pred_check_branch
          %1132 = sbr.rel (%p1130) target = $region56
        $region55: #{tpu_custom_call.1} parent=39 // pred_region
          %s1133 = smul.u32 3, %s23
          %s1135 = ssub.s32 192, 192
          %1136 = vsyncadd %s1126, %s1135
          %s1137 = smul.addr %s1133, 64
          %s1138 = scalar_lea.hbm %s5, %s1137
          %s1139 = sshll.u32 %s1129, 4
          %s1140 = int_to_ptr.vmem [resolvable:$true] %s1139
          %1145 = dma.vmem_to_hbm [thread:$0]  %s1140, 192, %s1138, %s1126, 64, 64, 4
        $region56: #{tpu_custom_call.1} parent=39 // pred_fallthru
          _
      $region40: #{tpu_custom_call.1} parent=5 // pred_fallthru
        _
      %p1146 = scmp.le.s32.totalorder 2, %s18
      // Predicated region
      $region57: #{tpu_custom_call.1} parent=5 // pred_check
        %p1147 = pneg %p1146
      $region58: #{tpu_custom_call.1} parent=5 // pred_check_branch
        %1149 = sbr.rel (%p1147) target = $region60
      $region59: #{tpu_custom_call.1} parent=5 // pred_region
        %s1150 = ssub.s32 %s18, 2
        // Predicated region
        $region61: #{tpu_custom_call.1} parent=59 // pred_check
          %p1151 = pneg %p157
        $region62: #{tpu_custom_call.1} parent=59 // pred_check_branch
          %1153 = sbr.rel (%p1151) target = $region64
        $region63: #{tpu_custom_call.1} parent=59 // pred_region
          %s1154 = sand.u32 %s142, 1
          %s1155 = scalar_lea.sflag [#allocation4], %s1154
          %s1156 = sand.u32 %s142, 1
          %s1157 = smul.addr %s1156, 12
          %s1158 = scalar_lea.vmem [#allocation8], %s1157
          %1159 = dma.done %s1155, 192
        $region64: #{tpu_custom_call.1} parent=59 // pred_fallthru
          _
      $region60: #{tpu_custom_call.1} parent=5 // pred_fallthru
        _
    $region6: #{tpu_custom_call.1} parent=1 // loop_footer
      %s22 = sadd.s32 1, %s18
    $region7: #{tpu_custom_call.1} parent=1 // loop_footer_branch
      %17 = sbr.rel target = $region3
    $region8: #{tpu_custom_call.1} parent=1 // loop_exit
      _
    %1160 = vsyncpa [#allocation3], 1
    %s1161 = scalar_lea.sflag [#allocation3], 1
    %1162 = vsyncpa %s1161, 1
    %1163 = vsyncpa [#allocation6], 1
    %1164 = vsyncpa [#allocation4], 1
    %s1165 = scalar_lea.sflag [#allocation4], 1
    %1166 = vsyncpa %s1165, 1

</llo_original>
